<compile_context>
chip_gen: v5e
topology: v5e:2x2
jax: 0.10.0
libtpu: 0.0.40
codegen_flags: <defaults>
</compile_context>

<pallas_src>
import math

import jax
import jax.numpy as jnp
from jax.experimental import pallas as pl
from jax.experimental.pallas import tpu as pltpu

LOG_STD_MAX = 2.0
LOG_STD_MIN = -20.0
EPS = 1e-6   # TODO(synk): EPS is referenced but never defined in the source module; using 1e-6.
LEAK = 0.01  # nn.LeakyReLU default negative_slope
_HALF_LOG_2PI = 0.5 * math.log(2.0 * math.pi)


# ------------------------------ fused kernel ---------------------------------

def _actor_kernel(x_ref, w_ref, noise_ref,
                  a1_ref, b1_ref, a2_ref, b2_ref,
                  wi_ref, bi_ref, wh_ref, bh_ref,
                  whead_ref, bhead_ref,
                  pi_ref, logpi_ref):
    """One batch element per grid step; everything VMEM-resident."""
    H = wh_ref.shape[0]          # GRU hidden size (= num_stocks + 1)
    T = a2_ref.shape[0]          # sequence length (= Himg - 4)
    F = wi_ref.shape[0]          # GRU feature size (= Wimg - 4)
    Wo1 = F + 2                  # conv1 output width

    # ---- conv1: banded matmul over sublane-stacked NCHW planes (C*Himg, Wimg)
    x = x_ref[0].astype(jnp.bfloat16)                                # (C*Hi, Wi)
    r1 = jnp.concatenate([x[:, dj:dj + Wo1] for dj in range(3)], axis=0)
    y1 = jnp.dot(a1_ref[...], r1, preferred_element_type=jnp.float32) + b1_ref[...]
    y1 = jnp.where(y1 > 0, y1, LEAK * y1)                            # (OC1*Ho1, Wo1)

    # ---- conv2: single output channel, produced lane-dense as (T, F) --------
    y1b = y1.astype(jnp.bfloat16)
    r2 = jnp.concatenate([y1b[:, dj:dj + F] for dj in range(3)], axis=0)
    y2 = jnp.dot(a2_ref[...], r2, preferred_element_type=jnp.float32) + b2_ref[...]
    y2 = jnp.where(y2 > 0, y2, LEAK * y2)                            # (T, F) GRU input

    # ---- GRU: all input projections at once, one hidden matmul per step -----
    xproj = jnp.dot(y2, wi_ref[...], preferred_element_type=jnp.float32) + bi_ref[...]
    wh = wh_ref[...]
    bh = bh_ref[...]
    h = jnp.zeros((1, H), dtype=jnp.float32)
    for t in range(T):                                               # static unroll
        xp = xproj[t:t + 1, :]                                       # (1, 3H)
        hp = jnp.dot(h, wh, preferred_element_type=jnp.float32) + bh
        r = jax.nn.sigmoid(xp[:, :H] + hp[:, :H])
        z = jax.nn.sigmoid(xp[:, H:2 * H] + hp[:, H:2 * H])
        n = jnp.tanh(xp[:, 2 * H:] + r * hp[:, 2 * H:])
        h = (1.0 - z) * n + z * h

    h = jnp.where(h > 0, h, LEAK * h)                                # leakyrelu(h_T)

    # ---- policy head: single (1, 2H) @ (2H, 2H) matmul ----------------------
    hw = jnp.concatenate([h, w_ref[0]], axis=-1)                     # (1, 2H)
    head = jnp.dot(hw, whead_ref[...], preferred_element_type=jnp.float32) + bhead_ref[...]
    mu = head[:, :H]
    log_std = jnp.clip(head[:, H:], LOG_STD_MIN, LOG_STD_MAX)
    std = jnp.exp(log_std)

    noise = noise_ref[0]                                             # (1, H)
    xs = mu + std * noise                                            # Normal(mu,std).sample()
    pi = jnp.tanh(xs)

    # Normal log_prob(xs): (xs - mu)/std == noise by construction.
    logp = -0.5 * noise * noise - log_std - _HALF_LOG_2PI
    logp = logp - jnp.log(1.0 - pi * pi + EPS)                       # tanh correction
    logpi_ref[0] = jnp.sum(logp, axis=-1, keepdims=True)

    pi = pi + 1.0
    total = jnp.sum(pi, axis=-1, keepdims=True)
    pi_ref[0] = pi * pl.reciprocal(total, approx=True)


# --------------------------- weight preprocessing -----------------------------

def _conv_band_matrix(w, out_rows, in_rows):
    """PyTorch conv weight (OC, IC, 3, 3) -> banded (OC*out_rows, 3*IC*in_rows) matrix.

    Column blocks ordered dj-major then (ic, input_row); pairs with a kernel rhs
    built as concat_dj of width-shifted (IC*in_rows, Wout) input planes.
    """
    OC, IC, KH, KW = w.shape
    eye = jnp.stack([jnp.eye(out_rows, in_rows, k=d, dtype=w.dtype) for d in range(KH)],
                    axis=0)                                          # (KH, out_rows, in_rows)
    a = jnp.einsum('ocdj,dih->oijch', w, eye)                        # (OC, out_rows, KW, IC, in_rows)
    return a.reshape(OC * out_rows, KW * IC * in_rows)


def _bcast_spec(shape):
    nd = len(shape)
    return pl.BlockSpec(shape, lambda b, _nd=nd: (0,) * _nd)


# --------------------------------- wrapper ------------------------------------

def gaussian_cnn_gru_actor_forward(x_nchw, w, params, noise):
    """Forward matching GaussianCNNGRUActor.forward (exploration=True, with_logprob=True)."""
    if x_nchw.ndim == 3:
        x_nchw = x_nchw[None]
        w = w[None]
    if noise.ndim == 1:
        noise = noise[None]

    x_nchw = x_nchw.astype(jnp.float32)
    B, C, Hi, Wi_img = x_nchw.shape
    H = w.shape[-1]
    Ho1 = Hi - 2
    Ho2, Wo2 = Hi - 4, Wi_img - 4
    OC1 = params['conv1_w'].shape[0]
    assert Wo2 == params['gru_wi'].shape[0], "conv output width must equal GRU input size"

    # NCHW kept as-is: fold (C, Himg) into sublane-stacked planes (free reshape).
    x2d = x_nchw.reshape(B, C * Hi, Wi_img)

    # Banded conv matrices (weight-only preprocessing; cacheable across steps).
    a1 = _conv_band_matrix(params['conv1_w'], Ho1, Hi).astype(jnp.bfloat16)   # (OC1*Ho1, 3*C*Hi)
    a2 = _conv_band_matrix(params['conv2_w'], Ho2, Ho1).astype(jnp.bfloat16)  # (Ho2, 3*OC1*Ho1)
    b1 = jnp.repeat(params['conv1_b'], Ho1).reshape(OC1 * Ho1, 1)
    b2 = params['conv2_b'].reshape(1, 1)

    w3 = w.astype(jnp.float32).reshape(B, 1, H)
    n3 = noise.astype(jnp.float32).reshape(B, 1, H)

    in_specs = [
        pl.BlockSpec((1, C * Hi, Wi_img), lambda b: (b, 0, 0)),   # x planes
        pl.BlockSpec((1, 1, H), lambda b: (b, 0, 0)),             # portfolio w
        pl.BlockSpec((1, 1, H), lambda b: (b, 0, 0)),             # noise
        _bcast_spec(a1.shape), _bcast_spec(b1.shape),
        _bcast_spec(a2.shape), _bcast_spec(b2.shape),
        _bcast_spec(params['gru_wi'].shape), _bcast_spec(params['gru_bi'].shape),
        _bcast_spec(params['gru_wh'].shape), _bcast_spec(params['gru_bh'].shape),
        _bcast_spec(params['head_w'].shape), _bcast_spec(params['head_b'].shape),
    ]
    out_specs = (pl.BlockSpec((1, 1, H), lambda b: (b, 0, 0)),
                 pl.BlockSpec((1, 1, 1), lambda b: (b, 0, 0)))
    out_shape = (jax.ShapeDtypeStruct((B, 1, H), jnp.float32),
                 jax.ShapeDtypeStruct((B, 1, 1), jnp.float32))

    pi3, logpi3 = pl.pallas_call(
        _actor_kernel,
        out_shape=out_shape,
        grid=(B,),
        in_specs=in_specs,
        out_specs=out_specs,
        compiler_params=pltpu.CompilerParams(dimension_semantics=("parallel",)),
    )(x2d, w3, n3, a1, b1, a2, b2,
      params['gru_wi'], params['gru_bi'], params['gru_wh'], params['gru_bh'],
      params['head_w'], params['head_b'])

    pi = pi3.reshape(B, H)
    log_pi = logpi3.reshape(B, 1)
    return jnp.squeeze(pi), log_pi


# ------------------------------ parameter init --------------------------------

def _kaiming_normal(key, shape, fan_in, a=0.01):
    gain = math.sqrt(2.0 / (1.0 + a * a))
    return (gain / math.sqrt(fan_in)) * jax.random.normal(key, shape, jnp.float32)


def init_params(key, in_channels, num_stocks):
    H = num_stocks + 1
    F = num_stocks - 4
    OC1 = in_channels * 2
    ks = iter(jax.random.split(key, 12))
    p = {}

    fin1 = 9 * in_channels
    p['conv1_w'] = _kaiming_normal(next(ks), (OC1, in_channels, 3, 3), fin1)
    p['conv1_b'] = jax.random.uniform(next(ks), (OC1,), jnp.float32,
                                      -1 / math.sqrt(fin1), 1 / math.sqrt(fin1))
    fin2 = 9 * OC1
    p['conv2_w'] = _kaiming_normal(next(ks), (1, OC1, 3, 3), fin2)
    p['conv2_b'] = jax.random.uniform(next(ks), (1,), jnp.float32,
                                      -1 / math.sqrt(fin2), 1 / math.sqrt(fin2))

    # GRU: PyTorch default init uniform(-1/sqrt(H), 1/sqrt(H)); gate order [r|z|n].
    s = 1.0 / math.sqrt(H)
    p['gru_wi'] = jax.random.uniform(next(ks), (F, 3 * H), jnp.float32, -s, s)
    p['gru_wh'] = jax.random.uniform(next(ks), (H, 3 * H), jnp.float32, -s, s)
    p['gru_bi'] = jax.random.uniform(next(ks), (1, 3 * H), jnp.float32, -s, s)
    p['gru_bh'] = jax.random.uniform(next(ks), (1, 3 * H), jnp.float32, -s, s)

    # fc_mu / fc_logstd fused: rows [h | w], columns [mu | log_std].
    fin = 2 * H
    sb = 1.0 / math.sqrt(fin)
    p['head_w'] = _kaiming_normal(next(ks), (2 * H, 2 * H), fin)
    p['head_b'] = jax.random.uniform(next(ks), (1, 2 * H), jnp.float32, -sb, sb)
    return p


# ----------------------------------- main --------------------------------------

if __name__ == "__main__":
    key = jax.random.PRNGKey(0)
    in_channels, num_stocks = 4, 16          # GRU: input = num_stocks-4 = 12, hidden = 17
    B, Himg, Wimg = 2, 12, num_stocks        # seq len after two valid 3x3 convs = Himg-4 = 8

    kx, kw, kn, kp = jax.random.split(key, 4)
    x = jax.random.normal(kx, (B, in_channels, Himg, Wimg), jnp.float32)   # NCHW (PyTorch conv.)
    wport = jax.random.normal(kw, (B, num_stocks + 1), jnp.float32)
    noise = jax.random.normal(kn, (B, num_stocks + 1), jnp.float32)        # drives Normal.sample()
    params = init_params(kp, in_channels, num_stocks)

    pi_action, log_pi = gaussian_cnn_gru_actor_forward(x, wport, params, noise)
    jax.block_until_ready((pi_action, log_pi))

    assert pi_action.shape == (B, num_stocks + 1)
    assert log_pi.shape == (B, 1)
    assert bool(jnp.all(jnp.isfinite(pi_action))) and bool(jnp.all(jnp.isfinite(log_pi)))
    print("KERNEL_OK")
</pallas_src>

<mosaic_0001>
module attributes {stable_mosaic.version = 11 : i64} {
  func.func @_actor_kernel(%arg0: i32, %arg1: memref<1x48x16xf32, #tpu.memory_space<vmem>>, %arg2: memref<1x1x17xf32, #tpu.memory_space<vmem>>, %arg3: memref<1x1x17xf32, #tpu.memory_space<vmem>>, %arg4: memref<80x144xbf16, #tpu.memory_space<vmem>>, %arg5: memref<80x1xf32, #tpu.memory_space<vmem>>, %arg6: memref<8x240xbf16, #tpu.memory_space<vmem>>, %arg7: memref<1x1xf32, #tpu.memory_space<vmem>>, %arg8: memref<12x51xf32, #tpu.memory_space<vmem>>, %arg9: memref<1x51xf32, #tpu.memory_space<vmem>>, %arg10: memref<17x51xf32, #tpu.memory_space<vmem>>, %arg11: memref<1x51xf32, #tpu.memory_space<vmem>>, %arg12: memref<34x34xf32, #tpu.memory_space<vmem>>, %arg13: memref<1x34xf32, #tpu.memory_space<vmem>>, %arg14: memref<1x1x17xf32, #tpu.memory_space<vmem>>, %arg15: memref<1x1x1xf32, #tpu.memory_space<vmem>>) attributes {dimension_semantics = [#tpu.dimension_semantics<parallel>], iteration_bounds = array<i64: 2>, scalar_prefetch = 0 : i64, scratch_operands = 0 : i64, tpu.core_type = #tpu.core_type<tc>, window_params = [{transform_indices = @transform_0, window_bounds = array<i64: 1, 48, 16>}, {transform_indices = @transform_1, window_bounds = array<i64: 1, 1, 17>}, {transform_indices = @transform_2, window_bounds = array<i64: 1, 1, 17>}, {pipeline_mode = #tpu.pipeline_mode<synchronous>, transform_indices = @transform_3, window_bounds = array<i64: 80, 144>}, {pipeline_mode = #tpu.pipeline_mode<synchronous>, transform_indices = @transform_4, window_bounds = array<i64: 80, 1>}, {pipeline_mode = #tpu.pipeline_mode<synchronous>, transform_indices = @transform_5, window_bounds = array<i64: 8, 240>}, {pipeline_mode = #tpu.pipeline_mode<synchronous>, transform_indices = @transform_6, window_bounds = array<i64: 1, 1>}, {pipeline_mode = #tpu.pipeline_mode<synchronous>, transform_indices = @transform_7, window_bounds = array<i64: 12, 51>}, {pipeline_mode = #tpu.pipeline_mode<synchronous>, transform_indices = @transform_8, window_bounds = array<i64: 1, 51>}, {pipeline_mode = #tpu.pipeline_mode<synchronous>, transform_indices = @transform_9, window_bounds = array<i64: 17, 51>}, {pipeline_mode = #tpu.pipeline_mode<synchronous>, transform_indices = @transform_10, window_bounds = array<i64: 1, 51>}, {pipeline_mode = #tpu.pipeline_mode<synchronous>, transform_indices = @transform_11, window_bounds = array<i64: 34, 34>}, {pipeline_mode = #tpu.pipeline_mode<synchronous>, transform_indices = @transform_12, window_bounds = array<i64: 1, 34>}, {transform_indices = @transform_13, window_bounds = array<i64: 1, 1, 17>}, {transform_indices = @transform_14, window_bounds = array<i64: 1, 1, 1>}]} {
    %c0 = arith.constant 0 : index
    %c0_0 = arith.constant 0 : index
    %c0_1 = arith.constant 0 : index
    %0 = vector.load %arg1[%c0, %c0_0, %c0_1] : memref<1x48x16xf32, #tpu.memory_space<vmem>>, vector<1x48x16xf32>
    %1 = vector.shape_cast %0 : vector<1x48x16xf32> to vector<48x16xf32>
    %2 = arith.truncf %1 : vector<48x16xf32> to vector<48x16xbf16>
    %3 = vector.extract_strided_slice %2 {offsets = [0, 0], sizes = [48, 14], strides = [1, 1]} : vector<48x16xbf16> to vector<48x14xbf16>
    %4 = vector.extract_strided_slice %2 {offsets = [0, 1], sizes = [48, 14], strides = [1, 1]} : vector<48x16xbf16> to vector<48x14xbf16>
    %5 = vector.extract_strided_slice %2 {offsets = [0, 2], sizes = [48, 14], strides = [1, 1]} : vector<48x16xbf16> to vector<48x14xbf16>
    %6 = tpu.concatenate %3, %4, %5 in 0 : vector<48x14xbf16>, vector<48x14xbf16>, vector<48x14xbf16> -> vector<144x14xbf16>
    %c0_2 = arith.constant 0 : index
    %c0_3 = arith.constant 0 : index
    %7 = vector.load %arg4[%c0_2, %c0_3] : memref<80x144xbf16, #tpu.memory_space<vmem>>, vector<80x144xbf16>
    %cst = arith.constant dense<0.000000e+00> : vector<80x14xf32>
    %8 = tpu.matmul %7, %6, %cst {dimension_numbers = #tpu.dot_dimension_numbers<[1], [0], [0], [1], [0, 0, 1, 1], [], []>} : vector<80x144xbf16>, vector<144x14xbf16>, vector<80x14xf32> -> vector<80x14xf32>
    %c0_4 = arith.constant 0 : index
    %c0_5 = arith.constant 0 : index
    %9 = vector.load %arg5[%c0_4, %c0_5] : memref<80x1xf32, #tpu.memory_space<vmem>>, vector<80x1xf32>
    %10 = vector.broadcast %9 : vector<80x1xf32> to vector<80x14xf32>
    %11 = arith.addf %8, %10 : vector<80x14xf32>
    %cst_6 = arith.constant 0.000000e+00 : f32
    %12 = vector.broadcast %cst_6 : f32 to vector<80x14xf32>
    %13 = arith.cmpf ogt, %11, %12 : vector<80x14xf32>
    %cst_7 = arith.constant 0.00999999977 : f32
    %14 = vector.broadcast %cst_7 : f32 to vector<80x14xf32>
    %15 = arith.mulf %14, %11 : vector<80x14xf32>
    %16 = arith.select %13, %11, %15 : vector<80x14xi1>, vector<80x14xf32>
    %17 = arith.truncf %16 : vector<80x14xf32> to vector<80x14xbf16>
    %18 = vector.extract_strided_slice %17 {offsets = [0, 0], sizes = [80, 12], strides = [1, 1]} : vector<80x14xbf16> to vector<80x12xbf16>
    %19 = vector.extract_strided_slice %17 {offsets = [0, 1], sizes = [80, 12], strides = [1, 1]} : vector<80x14xbf16> to vector<80x12xbf16>
    %20 = vector.extract_strided_slice %17 {offsets = [0, 2], sizes = [80, 12], strides = [1, 1]} : vector<80x14xbf16> to vector<80x12xbf16>
    %21 = tpu.concatenate %18, %19, %20 in 0 : vector<80x12xbf16>, vector<80x12xbf16>, vector<80x12xbf16> -> vector<240x12xbf16>
    %c0_8 = arith.constant 0 : index
    %c0_9 = arith.constant 0 : index
    %22 = vector.load %arg6[%c0_8, %c0_9] : memref<8x240xbf16, #tpu.memory_space<vmem>>, vector<8x240xbf16>
    %cst_10 = arith.constant dense<0.000000e+00> : vector<8x12xf32>
    %23 = tpu.matmul %22, %21, %cst_10 {dimension_numbers = #tpu.dot_dimension_numbers<[1], [0], [0], [1], [0, 0, 1, 1], [], []>} : vector<8x240xbf16>, vector<240x12xbf16>, vector<8x12xf32> -> vector<8x12xf32>
    %c0_11 = arith.constant 0 : index
    %c0_12 = arith.constant 0 : index
    %24 = vector.load %arg7[%c0_11, %c0_12] : memref<1x1xf32, #tpu.memory_space<vmem>>, vector<1x1xf32>
    %25 = vector.broadcast %24 : vector<1x1xf32> to vector<8x12xf32>
    %26 = arith.addf %23, %25 : vector<8x12xf32>
    %cst_13 = arith.constant 0.000000e+00 : f32
    %27 = vector.broadcast %cst_13 : f32 to vector<8x12xf32>
    %28 = arith.cmpf ogt, %26, %27 : vector<8x12xf32>
    %cst_14 = arith.constant 0.00999999977 : f32
    %29 = vector.broadcast %cst_14 : f32 to vector<8x12xf32>
    %30 = arith.mulf %29, %26 : vector<8x12xf32>
    %31 = arith.select %28, %26, %30 : vector<8x12xi1>, vector<8x12xf32>
    %c0_15 = arith.constant 0 : index
    %c0_16 = arith.constant 0 : index
    %32 = vector.load %arg8[%c0_15, %c0_16] : memref<12x51xf32, #tpu.memory_space<vmem>>, vector<12x51xf32>
    %cst_17 = arith.constant dense<0.000000e+00> : vector<8x51xf32>
    %33 = tpu.matmul %31, %32, %cst_17 {dimension_numbers = #tpu.dot_dimension_numbers<[1], [0], [0], [1], [0, 0, 1, 1], [], []>} : vector<8x12xf32>, vector<12x51xf32>, vector<8x51xf32> -> vector<8x51xf32>
    %c0_18 = arith.constant 0 : index
    %c0_19 = arith.constant 0 : index
    %34 = vector.load %arg9[%c0_18, %c0_19] : memref<1x51xf32, #tpu.memory_space<vmem>>, vector<1x51xf32>
    %35 = vector.broadcast %34 : vector<1x51xf32> to vector<8x51xf32>
    %36 = arith.addf %33, %35 : vector<8x51xf32>
    %c0_20 = arith.constant 0 : index
    %c0_21 = arith.constant 0 : index
    %37 = vector.load %arg10[%c0_20, %c0_21] : memref<17x51xf32, #tpu.memory_space<vmem>>, vector<17x51xf32>
    %c0_22 = arith.constant 0 : index
    %c0_23 = arith.constant 0 : index
    %38 = vector.load %arg11[%c0_22, %c0_23] : memref<1x51xf32, #tpu.memory_space<vmem>>, vector<1x51xf32>
    %cst_24 = arith.constant 0.000000e+00 : f32
    %39 = vector.broadcast %cst_24 : f32 to vector<1x17xf32>
    %40 = vector.extract_strided_slice %36 {offsets = [0, 0], sizes = [1, 51], strides = [1, 1]} : vector<8x51xf32> to vector<1x51xf32>
    %cst_25 = arith.constant dense<0.000000e+00> : vector<1x51xf32>
    %41 = tpu.matmul %39, %37, %cst_25 {dimension_numbers = #tpu.dot_dimension_numbers<[1], [0], [0], [1], [0, 0, 1, 1], [], []>} : vector<1x17xf32>, vector<17x51xf32>, vector<1x51xf32> -> vector<1x51xf32>
    %42 = arith.addf %41, %38 : vector<1x51xf32>
    %43 = vector.extract_strided_slice %40 {offsets = [0, 0], sizes = [1, 17], strides = [1, 1]} : vector<1x51xf32> to vector<1x17xf32>
    %44 = vector.extract_strided_slice %42 {offsets = [0, 0], sizes = [1, 17], strides = [1, 1]} : vector<1x51xf32> to vector<1x17xf32>
    %45 = arith.addf %43, %44 : vector<1x17xf32>
    %46 = arith.negf %45 : vector<1x17xf32>
    %47 = math.exp %46 : vector<1x17xf32>
    %cst_26 = arith.constant 1.000000e+00 : f32
    %48 = vector.broadcast %cst_26 : f32 to vector<1x17xf32>
    %49 = arith.addf %48, %47 : vector<1x17xf32>
    %50 = arith.divf %48, %49 : vector<1x17xf32>
    %51 = vector.extract_strided_slice %40 {offsets = [0, 17], sizes = [1, 17], strides = [1, 1]} : vector<1x51xf32> to vector<1x17xf32>
    %52 = vector.extract_strided_slice %42 {offsets = [0, 17], sizes = [1, 17], strides = [1, 1]} : vector<1x51xf32> to vector<1x17xf32>
    %53 = arith.addf %51, %52 : vector<1x17xf32>
    %54 = arith.negf %53 : vector<1x17xf32>
    %55 = math.exp %54 : vector<1x17xf32>
    %cst_27 = arith.constant 1.000000e+00 : f32
    %56 = vector.broadcast %cst_27 : f32 to vector<1x17xf32>
    %57 = arith.addf %56, %55 : vector<1x17xf32>
    %58 = arith.divf %56, %57 : vector<1x17xf32>
    %59 = vector.extract_strided_slice %40 {offsets = [0, 34], sizes = [1, 17], strides = [1, 1]} : vector<1x51xf32> to vector<1x17xf32>
    %60 = vector.extract_strided_slice %42 {offsets = [0, 34], sizes = [1, 17], strides = [1, 1]} : vector<1x51xf32> to vector<1x17xf32>
    %61 = arith.mulf %50, %60 : vector<1x17xf32>
    %62 = arith.addf %59, %61 : vector<1x17xf32>
    %63 = math.tanh %62 : vector<1x17xf32>
    %cst_28 = arith.constant 1.000000e+00 : f32
    %64 = vector.broadcast %cst_28 : f32 to vector<1x17xf32>
    %65 = arith.subf %64, %58 : vector<1x17xf32>
    %66 = arith.mulf %65, %63 : vector<1x17xf32>
    %67 = arith.mulf %58, %39 : vector<1x17xf32>
    %68 = arith.addf %66, %67 : vector<1x17xf32>
    %69 = vector.extract_strided_slice %36 {offsets = [1, 0], sizes = [1, 51], strides = [1, 1]} : vector<8x51xf32> to vector<1x51xf32>
    %cst_29 = arith.constant dense<0.000000e+00> : vector<1x51xf32>
    %70 = tpu.matmul %68, %37, %cst_29 {dimension_numbers = #tpu.dot_dimension_numbers<[1], [0], [0], [1], [0, 0, 1, 1], [], []>} : vector<1x17xf32>, vector<17x51xf32>, vector<1x51xf32> -> vector<1x51xf32>
    %71 = arith.addf %70, %38 : vector<1x51xf32>
    %72 = vector.extract_strided_slice %69 {offsets = [0, 0], sizes = [1, 17], strides = [1, 1]} : vector<1x51xf32> to vector<1x17xf32>
    %73 = vector.extract_strided_slice %71 {offsets = [0, 0], sizes = [1, 17], strides = [1, 1]} : vector<1x51xf32> to vector<1x17xf32>
    %74 = arith.addf %72, %73 : vector<1x17xf32>
    %75 = arith.negf %74 : vector<1x17xf32>
    %76 = math.exp %75 : vector<1x17xf32>
    %cst_30 = arith.constant 1.000000e+00 : f32
    %77 = vector.broadcast %cst_30 : f32 to vector<1x17xf32>
    %78 = arith.addf %77, %76 : vector<1x17xf32>
    %79 = arith.divf %77, %78 : vector<1x17xf32>
    %80 = vector.extract_strided_slice %69 {offsets = [0, 17], sizes = [1, 17], strides = [1, 1]} : vector<1x51xf32> to vector<1x17xf32>
    %81 = vector.extract_strided_slice %71 {offsets = [0, 17], sizes = [1, 17], strides = [1, 1]} : vector<1x51xf32> to vector<1x17xf32>
    %82 = arith.addf %80, %81 : vector<1x17xf32>
    %83 = arith.negf %82 : vector<1x17xf32>
    %84 = math.exp %83 : vector<1x17xf32>
    %cst_31 = arith.constant 1.000000e+00 : f32
    %85 = vector.broadcast %cst_31 : f32 to vector<1x17xf32>
    %86 = arith.addf %85, %84 : vector<1x17xf32>
    %87 = arith.divf %85, %86 : vector<1x17xf32>
    %88 = vector.extract_strided_slice %69 {offsets = [0, 34], sizes = [1, 17], strides = [1, 1]} : vector<1x51xf32> to vector<1x17xf32>
    %89 = vector.extract_strided_slice %71 {offsets = [0, 34], sizes = [1, 17], strides = [1, 1]} : vector<1x51xf32> to vector<1x17xf32>
    %90 = arith.mulf %79, %89 : vector<1x17xf32>
    %91 = arith.addf %88, %90 : vector<1x17xf32>
    %92 = math.tanh %91 : vector<1x17xf32>
    %cst_32 = arith.constant 1.000000e+00 : f32
    %93 = vector.broadcast %cst_32 : f32 to vector<1x17xf32>
    %94 = arith.subf %93, %87 : vector<1x17xf32>
    %95 = arith.mulf %94, %92 : vector<1x17xf32>
    %96 = arith.mulf %87, %68 : vector<1x17xf32>
    %97 = arith.addf %95, %96 : vector<1x17xf32>
    %98 = vector.extract_strided_slice %36 {offsets = [2, 0], sizes = [1, 51], strides = [1, 1]} : vector<8x51xf32> to vector<1x51xf32>
    %cst_33 = arith.constant dense<0.000000e+00> : vector<1x51xf32>
    %99 = tpu.matmul %97, %37, %cst_33 {dimension_numbers = #tpu.dot_dimension_numbers<[1], [0], [0], [1], [0, 0, 1, 1], [], []>} : vector<1x17xf32>, vector<17x51xf32>, vector<1x51xf32> -> vector<1x51xf32>
    %100 = arith.addf %99, %38 : vector<1x51xf32>
    %101 = vector.extract_strided_slice %98 {offsets = [0, 0], sizes = [1, 17], strides = [1, 1]} : vector<1x51xf32> to vector<1x17xf32>
    %102 = vector.extract_strided_slice %100 {offsets = [0, 0], sizes = [1, 17], strides = [1, 1]} : vector<1x51xf32> to vector<1x17xf32>
    %103 = arith.addf %101, %102 : vector<1x17xf32>
    %104 = arith.negf %103 : vector<1x17xf32>
    %105 = math.exp %104 : vector<1x17xf32>
    %cst_34 = arith.constant 1.000000e+00 : f32
    %106 = vector.broadcast %cst_34 : f32 to vector<1x17xf32>
    %107 = arith.addf %106, %105 : vector<1x17xf32>
    %108 = arith.divf %106, %107 : vector<1x17xf32>
    %109 = vector.extract_strided_slice %98 {offsets = [0, 17], sizes = [1, 17], strides = [1, 1]} : vector<1x51xf32> to vector<1x17xf32>
    %110 = vector.extract_strided_slice %100 {offsets = [0, 17], sizes = [1, 17], strides = [1, 1]} : vector<1x51xf32> to vector<1x17xf32>
    %111 = arith.addf %109, %110 : vector<1x17xf32>
    %112 = arith.negf %111 : vector<1x17xf32>
    %113 = math.exp %112 : vector<1x17xf32>
    %cst_35 = arith.constant 1.000000e+00 : f32
    %114 = vector.broadcast %cst_35 : f32 to vector<1x17xf32>
    %115 = arith.addf %114, %113 : vector<1x17xf32>
    %116 = arith.divf %114, %115 : vector<1x17xf32>
    %117 = vector.extract_strided_slice %98 {offsets = [0, 34], sizes = [1, 17], strides = [1, 1]} : vector<1x51xf32> to vector<1x17xf32>
    %118 = vector.extract_strided_slice %100 {offsets = [0, 34], sizes = [1, 17], strides = [1, 1]} : vector<1x51xf32> to vector<1x17xf32>
    %119 = arith.mulf %108, %118 : vector<1x17xf32>
    %120 = arith.addf %117, %119 : vector<1x17xf32>
    %121 = math.tanh %120 : vector<1x17xf32>
    %cst_36 = arith.constant 1.000000e+00 : f32
    %122 = vector.broadcast %cst_36 : f32 to vector<1x17xf32>
    %123 = arith.subf %122, %116 : vector<1x17xf32>
    %124 = arith.mulf %123, %121 : vector<1x17xf32>
    %125 = arith.mulf %116, %97 : vector<1x17xf32>
    %126 = arith.addf %124, %125 : vector<1x17xf32>
    %127 = vector.extract_strided_slice %36 {offsets = [3, 0], sizes = [1, 51], strides = [1, 1]} : vector<8x51xf32> to vector<1x51xf32>
    %cst_37 = arith.constant dense<0.000000e+00> : vector<1x51xf32>
    %128 = tpu.matmul %126, %37, %cst_37 {dimension_numbers = #tpu.dot_dimension_numbers<[1], [0], [0], [1], [0, 0, 1, 1], [], []>} : vector<1x17xf32>, vector<17x51xf32>, vector<1x51xf32> -> vector<1x51xf32>
    %129 = arith.addf %128, %38 : vector<1x51xf32>
    %130 = vector.extract_strided_slice %127 {offsets = [0, 0], sizes = [1, 17], strides = [1, 1]} : vector<1x51xf32> to vector<1x17xf32>
    %131 = vector.extract_strided_slice %129 {offsets = [0, 0], sizes = [1, 17], strides = [1, 1]} : vector<1x51xf32> to vector<1x17xf32>
    %132 = arith.addf %130, %131 : vector<1x17xf32>
    %133 = arith.negf %132 : vector<1x17xf32>
    %134 = math.exp %133 : vector<1x17xf32>
    %cst_38 = arith.constant 1.000000e+00 : f32
    %135 = vector.broadcast %cst_38 : f32 to vector<1x17xf32>
    %136 = arith.addf %135, %134 : vector<1x17xf32>
    %137 = arith.divf %135, %136 : vector<1x17xf32>
    %138 = vector.extract_strided_slice %127 {offsets = [0, 17], sizes = [1, 17], strides = [1, 1]} : vector<1x51xf32> to vector<1x17xf32>
    %139 = vector.extract_strided_slice %129 {offsets = [0, 17], sizes = [1, 17], strides = [1, 1]} : vector<1x51xf32> to vector<1x17xf32>
    %140 = arith.addf %138, %139 : vector<1x17xf32>
    %141 = arith.negf %140 : vector<1x17xf32>
    %142 = math.exp %141 : vector<1x17xf32>
    %cst_39 = arith.constant 1.000000e+00 : f32
    %143 = vector.broadcast %cst_39 : f32 to vector<1x17xf32>
    %144 = arith.addf %143, %142 : vector<1x17xf32>
    %145 = arith.divf %143, %144 : vector<1x17xf32>
    %146 = vector.extract_strided_slice %127 {offsets = [0, 34], sizes = [1, 17], strides = [1, 1]} : vector<1x51xf32> to vector<1x17xf32>
    %147 = vector.extract_strided_slice %129 {offsets = [0, 34], sizes = [1, 17], strides = [1, 1]} : vector<1x51xf32> to vector<1x17xf32>
    %148 = arith.mulf %137, %147 : vector<1x17xf32>
    %149 = arith.addf %146, %148 : vector<1x17xf32>
    %150 = math.tanh %149 : vector<1x17xf32>
    %cst_40 = arith.constant 1.000000e+00 : f32
    %151 = vector.broadcast %cst_40 : f32 to vector<1x17xf32>
    %152 = arith.subf %151, %145 : vector<1x17xf32>
    %153 = arith.mulf %152, %150 : vector<1x17xf32>
    %154 = arith.mulf %145, %126 : vector<1x17xf32>
    %155 = arith.addf %153, %154 : vector<1x17xf32>
    %156 = vector.extract_strided_slice %36 {offsets = [4, 0], sizes = [1, 51], strides = [1, 1]} : vector<8x51xf32> to vector<1x51xf32>
    %cst_41 = arith.constant dense<0.000000e+00> : vector<1x51xf32>
    %157 = tpu.matmul %155, %37, %cst_41 {dimension_numbers = #tpu.dot_dimension_numbers<[1], [0], [0], [1], [0, 0, 1, 1], [], []>} : vector<1x17xf32>, vector<17x51xf32>, vector<1x51xf32> -> vector<1x51xf32>
    %158 = arith.addf %157, %38 : vector<1x51xf32>
    %159 = vector.extract_strided_slice %156 {offsets = [0, 0], sizes = [1, 17], strides = [1, 1]} : vector<1x51xf32> to vector<1x17xf32>
    %160 = vector.extract_strided_slice %158 {offsets = [0, 0], sizes = [1, 17], strides = [1, 1]} : vector<1x51xf32> to vector<1x17xf32>
    %161 = arith.addf %159, %160 : vector<1x17xf32>
    %162 = arith.negf %161 : vector<1x17xf32>
    %163 = math.exp %162 : vector<1x17xf32>
    %cst_42 = arith.constant 1.000000e+00 : f32
    %164 = vector.broadcast %cst_42 : f32 to vector<1x17xf32>
    %165 = arith.addf %164, %163 : vector<1x17xf32>
    %166 = arith.divf %164, %165 : vector<1x17xf32>
    %167 = vector.extract_strided_slice %156 {offsets = [0, 17], sizes = [1, 17], strides = [1, 1]} : vector<1x51xf32> to vector<1x17xf32>
    %168 = vector.extract_strided_slice %158 {offsets = [0, 17], sizes = [1, 17], strides = [1, 1]} : vector<1x51xf32> to vector<1x17xf32>
    %169 = arith.addf %167, %168 : vector<1x17xf32>
    %170 = arith.negf %169 : vector<1x17xf32>
    %171 = math.exp %170 : vector<1x17xf32>
    %cst_43 = arith.constant 1.000000e+00 : f32
    %172 = vector.broadcast %cst_43 : f32 to vector<1x17xf32>
    %173 = arith.addf %172, %171 : vector<1x17xf32>
    %174 = arith.divf %172, %173 : vector<1x17xf32>
    %175 = vector.extract_strided_slice %156 {offsets = [0, 34], sizes = [1, 17], strides = [1, 1]} : vector<1x51xf32> to vector<1x17xf32>
    %176 = vector.extract_strided_slice %158 {offsets = [0, 34], sizes = [1, 17], strides = [1, 1]} : vector<1x51xf32> to vector<1x17xf32>
    %177 = arith.mulf %166, %176 : vector<1x17xf32>
    %178 = arith.addf %175, %177 : vector<1x17xf32>
    %179 = math.tanh %178 : vector<1x17xf32>
    %cst_44 = arith.constant 1.000000e+00 : f32
    %180 = vector.broadcast %cst_44 : f32 to vector<1x17xf32>
    %181 = arith.subf %180, %174 : vector<1x17xf32>
    %182 = arith.mulf %181, %179 : vector<1x17xf32>
    %183 = arith.mulf %174, %155 : vector<1x17xf32>
    %184 = arith.addf %182, %183 : vector<1x17xf32>
    %185 = vector.extract_strided_slice %36 {offsets = [5, 0], sizes = [1, 51], strides = [1, 1]} : vector<8x51xf32> to vector<1x51xf32>
    %cst_45 = arith.constant dense<0.000000e+00> : vector<1x51xf32>
    %186 = tpu.matmul %184, %37, %cst_45 {dimension_numbers = #tpu.dot_dimension_numbers<[1], [0], [0], [1], [0, 0, 1, 1], [], []>} : vector<1x17xf32>, vector<17x51xf32>, vector<1x51xf32> -> vector<1x51xf32>
    %187 = arith.addf %186, %38 : vector<1x51xf32>
    %188 = vector.extract_strided_slice %185 {offsets = [0, 0], sizes = [1, 17], strides = [1, 1]} : vector<1x51xf32> to vector<1x17xf32>
    %189 = vector.extract_strided_slice %187 {offsets = [0, 0], sizes = [1, 17], strides = [1, 1]} : vector<1x51xf32> to vector<1x17xf32>
    %190 = arith.addf %188, %189 : vector<1x17xf32>
    %191 = arith.negf %190 : vector<1x17xf32>
    %192 = math.exp %191 : vector<1x17xf32>
    %cst_46 = arith.constant 1.000000e+00 : f32
    %193 = vector.broadcast %cst_46 : f32 to vector<1x17xf32>
    %194 = arith.addf %193, %192 : vector<1x17xf32>
    %195 = arith.divf %193, %194 : vector<1x17xf32>
    %196 = vector.extract_strided_slice %185 {offsets = [0, 17], sizes = [1, 17], strides = [1, 1]} : vector<1x51xf32> to vector<1x17xf32>
    %197 = vector.extract_strided_slice %187 {offsets = [0, 17], sizes = [1, 17], strides = [1, 1]} : vector<1x51xf32> to vector<1x17xf32>
    %198 = arith.addf %196, %197 : vector<1x17xf32>
    %199 = arith.negf %198 : vector<1x17xf32>
    %200 = math.exp %199 : vector<1x17xf32>
    %cst_47 = arith.constant 1.000000e+00 : f32
    %201 = vector.broadcast %cst_47 : f32 to vector<1x17xf32>
    %202 = arith.addf %201, %200 : vector<1x17xf32>
    %203 = arith.divf %201, %202 : vector<1x17xf32>
    %204 = vector.extract_strided_slice %185 {offsets = [0, 34], sizes = [1, 17], strides = [1, 1]} : vector<1x51xf32> to vector<1x17xf32>
    %205 = vector.extract_strided_slice %187 {offsets = [0, 34], sizes = [1, 17], strides = [1, 1]} : vector<1x51xf32> to vector<1x17xf32>
    %206 = arith.mulf %195, %205 : vector<1x17xf32>
    %207 = arith.addf %204, %206 : vector<1x17xf32>
    %208 = math.tanh %207 : vector<1x17xf32>
    %cst_48 = arith.constant 1.000000e+00 : f32
    %209 = vector.broadcast %cst_48 : f32 to vector<1x17xf32>
    %210 = arith.subf %209, %203 : vector<1x17xf32>
    %211 = arith.mulf %210, %208 : vector<1x17xf32>
    %212 = arith.mulf %203, %184 : vector<1x17xf32>
    %213 = arith.addf %211, %212 : vector<1x17xf32>
    %214 = vector.extract_strided_slice %36 {offsets = [6, 0], sizes = [1, 51], strides = [1, 1]} : vector<8x51xf32> to vector<1x51xf32>
    %cst_49 = arith.constant dense<0.000000e+00> : vector<1x51xf32>
    %215 = tpu.matmul %213, %37, %cst_49 {dimension_numbers = #tpu.dot_dimension_numbers<[1], [0], [0], [1], [0, 0, 1, 1], [], []>} : vector<1x17xf32>, vector<17x51xf32>, vector<1x51xf32> -> vector<1x51xf32>
    %216 = arith.addf %215, %38 : vector<1x51xf32>
    %217 = vector.extract_strided_slice %214 {offsets = [0, 0], sizes = [1, 17], strides = [1, 1]} : vector<1x51xf32> to vector<1x17xf32>
    %218 = vector.extract_strided_slice %216 {offsets = [0, 0], sizes = [1, 17], strides = [1, 1]} : vector<1x51xf32> to vector<1x17xf32>
    %219 = arith.addf %217, %218 : vector<1x17xf32>
    %220 = arith.negf %219 : vector<1x17xf32>
    %221 = math.exp %220 : vector<1x17xf32>
    %cst_50 = arith.constant 1.000000e+00 : f32
    %222 = vector.broadcast %cst_50 : f32 to vector<1x17xf32>
    %223 = arith.addf %222, %221 : vector<1x17xf32>
    %224 = arith.divf %222, %223 : vector<1x17xf32>
    %225 = vector.extract_strided_slice %214 {offsets = [0, 17], sizes = [1, 17], strides = [1, 1]} : vector<1x51xf32> to vector<1x17xf32>
    %226 = vector.extract_strided_slice %216 {offsets = [0, 17], sizes = [1, 17], strides = [1, 1]} : vector<1x51xf32> to vector<1x17xf32>
    %227 = arith.addf %225, %226 : vector<1x17xf32>
    %228 = arith.negf %227 : vector<1x17xf32>
    %229 = math.exp %228 : vector<1x17xf32>
    %cst_51 = arith.constant 1.000000e+00 : f32
    %230 = vector.broadcast %cst_51 : f32 to vector<1x17xf32>
    %231 = arith.addf %230, %229 : vector<1x17xf32>
    %232 = arith.divf %230, %231 : vector<1x17xf32>
    %233 = vector.extract_strided_slice %214 {offsets = [0, 34], sizes = [1, 17], strides = [1, 1]} : vector<1x51xf32> to vector<1x17xf32>
    %234 = vector.extract_strided_slice %216 {offsets = [0, 34], sizes = [1, 17], strides = [1, 1]} : vector<1x51xf32> to vector<1x17xf32>
    %235 = arith.mulf %224, %234 : vector<1x17xf32>
    %236 = arith.addf %233, %235 : vector<1x17xf32>
    %237 = math.tanh %236 : vector<1x17xf32>
    %cst_52 = arith.constant 1.000000e+00 : f32
    %238 = vector.broadcast %cst_52 : f32 to vector<1x17xf32>
    %239 = arith.subf %238, %232 : vector<1x17xf32>
    %240 = arith.mulf %239, %237 : vector<1x17xf32>
    %241 = arith.mulf %232, %213 : vector<1x17xf32>
    %242 = arith.addf %240, %241 : vector<1x17xf32>
    %243 = vector.extract_strided_slice %36 {offsets = [7, 0], sizes = [1, 51], strides = [1, 1]} : vector<8x51xf32> to vector<1x51xf32>
    %cst_53 = arith.constant dense<0.000000e+00> : vector<1x51xf32>
    %244 = tpu.matmul %242, %37, %cst_53 {dimension_numbers = #tpu.dot_dimension_numbers<[1], [0], [0], [1], [0, 0, 1, 1], [], []>} : vector<1x17xf32>, vector<17x51xf32>, vector<1x51xf32> -> vector<1x51xf32>
    %245 = arith.addf %244, %38 : vector<1x51xf32>
    %246 = vector.extract_strided_slice %243 {offsets = [0, 0], sizes = [1, 17], strides = [1, 1]} : vector<1x51xf32> to vector<1x17xf32>
    %247 = vector.extract_strided_slice %245 {offsets = [0, 0], sizes = [1, 17], strides = [1, 1]} : vector<1x51xf32> to vector<1x17xf32>
    %248 = arith.addf %246, %247 : vector<1x17xf32>
    %249 = arith.negf %248 : vector<1x17xf32>
    %250 = math.exp %249 : vector<1x17xf32>
    %cst_54 = arith.constant 1.000000e+00 : f32
    %251 = vector.broadcast %cst_54 : f32 to vector<1x17xf32>
    %252 = arith.addf %251, %250 : vector<1x17xf32>
    %253 = arith.divf %251, %252 : vector<1x17xf32>
    %254 = vector.extract_strided_slice %243 {offsets = [0, 17], sizes = [1, 17], strides = [1, 1]} : vector<1x51xf32> to vector<1x17xf32>
    %255 = vector.extract_strided_slice %245 {offsets = [0, 17], sizes = [1, 17], strides = [1, 1]} : vector<1x51xf32> to vector<1x17xf32>
    %256 = arith.addf %254, %255 : vector<1x17xf32>
    %257 = arith.negf %256 : vector<1x17xf32>
    %258 = math.exp %257 : vector<1x17xf32>
    %cst_55 = arith.constant 1.000000e+00 : f32
    %259 = vector.broadcast %cst_55 : f32 to vector<1x17xf32>
    %260 = arith.addf %259, %258 : vector<1x17xf32>
    %261 = arith.divf %259, %260 : vector<1x17xf32>
    %262 = vector.extract_strided_slice %243 {offsets = [0, 34], sizes = [1, 17], strides = [1, 1]} : vector<1x51xf32> to vector<1x17xf32>
    %263 = vector.extract_strided_slice %245 {offsets = [0, 34], sizes = [1, 17], strides = [1, 1]} : vector<1x51xf32> to vector<1x17xf32>
    %264 = arith.mulf %253, %263 : vector<1x17xf32>
    %265 = arith.addf %262, %264 : vector<1x17xf32>
    %266 = math.tanh %265 : vector<1x17xf32>
    %cst_56 = arith.constant 1.000000e+00 : f32
    %267 = vector.broadcast %cst_56 : f32 to vector<1x17xf32>
    %268 = arith.subf %267, %261 : vector<1x17xf32>
    %269 = arith.mulf %268, %266 : vector<1x17xf32>
    %270 = arith.mulf %261, %242 : vector<1x17xf32>
    %271 = arith.addf %269, %270 : vector<1x17xf32>
    %cst_57 = arith.constant 0.000000e+00 : f32
    %272 = vector.broadcast %cst_57 : f32 to vector<1x17xf32>
    %273 = arith.cmpf ogt, %271, %272 : vector<1x17xf32>
    %cst_58 = arith.constant 0.00999999977 : f32
    %274 = vector.broadcast %cst_58 : f32 to vector<1x17xf32>
    %275 = arith.mulf %274, %271 : vector<1x17xf32>
    %276 = arith.select %273, %271, %275 : vector<1x17xi1>, vector<1x17xf32>
    %c0_59 = arith.constant 0 : index
    %c0_60 = arith.constant 0 : index
    %c0_61 = arith.constant 0 : index
    %277 = vector.load %arg2[%c0_59, %c0_60, %c0_61] : memref<1x1x17xf32, #tpu.memory_space<vmem>>, vector<1x1x17xf32>
    %278 = vector.shape_cast %277 : vector<1x1x17xf32> to vector<1x17xf32>
    %279 = tpu.concatenate %276, %278 in 1 : vector<1x17xf32>, vector<1x17xf32> -> vector<1x34xf32>
    %c0_62 = arith.constant 0 : index
    %c0_63 = arith.constant 0 : index
    %280 = vector.load %arg12[%c0_62, %c0_63] : memref<34x34xf32, #tpu.memory_space<vmem>>, vector<34x34xf32>
    %cst_64 = arith.constant dense<0.000000e+00> : vector<1x34xf32>
    %281 = tpu.matmul %279, %280, %cst_64 {dimension_numbers = #tpu.dot_dimension_numbers<[1], [0], [0], [1], [0, 0, 1, 1], [], []>} : vector<1x34xf32>, vector<34x34xf32>, vector<1x34xf32> -> vector<1x34xf32>
    %c0_65 = arith.constant 0 : index
    %c0_66 = arith.constant 0 : index
    %282 = vector.load %arg13[%c0_65, %c0_66] : memref<1x34xf32, #tpu.memory_space<vmem>>, vector<1x34xf32>
    %283 = arith.addf %281, %282 : vector<1x34xf32>
    %284 = vector.extract_strided_slice %283 {offsets = [0, 0], sizes = [1, 17], strides = [1, 1]} : vector<1x34xf32> to vector<1x17xf32>
    %285 = vector.extract_strided_slice %283 {offsets = [0, 17], sizes = [1, 17], strides = [1, 1]} : vector<1x34xf32> to vector<1x17xf32>
    %cst_67 = arith.constant -2.000000e+01 : f32
    %cst_68 = arith.constant 2.000000e+00 : f32
    %286 = vector.broadcast %cst_67 : f32 to vector<1x17xf32>
    %287 = arith.maximumf %286, %285 : vector<1x17xf32>
    %288 = vector.broadcast %cst_68 : f32 to vector<1x17xf32>
    %289 = arith.minimumf %288, %287 : vector<1x17xf32>
    %290 = math.exp %289 : vector<1x17xf32>
    %c0_69 = arith.constant 0 : index
    %c0_70 = arith.constant 0 : index
    %c0_71 = arith.constant 0 : index
    %291 = vector.load %arg3[%c0_69, %c0_70, %c0_71] : memref<1x1x17xf32, #tpu.memory_space<vmem>>, vector<1x1x17xf32>
    %292 = vector.shape_cast %291 : vector<1x1x17xf32> to vector<1x17xf32>
    %293 = arith.mulf %290, %292 : vector<1x17xf32>
    %294 = arith.addf %284, %293 : vector<1x17xf32>
    %295 = math.tanh %294 : vector<1x17xf32>
    %cst_72 = arith.constant -5.000000e-01 : f32
    %296 = vector.broadcast %cst_72 : f32 to vector<1x17xf32>
    %297 = arith.mulf %296, %292 : vector<1x17xf32>
    %298 = arith.mulf %297, %292 : vector<1x17xf32>
    %299 = arith.subf %298, %289 : vector<1x17xf32>
    %cst_73 = arith.constant 0.918938517 : f32
    %300 = vector.broadcast %cst_73 : f32 to vector<1x17xf32>
    %301 = arith.subf %299, %300 : vector<1x17xf32>
    %302 = arith.mulf %295, %295 : vector<1x17xf32>
    %cst_74 = arith.constant 1.000000e+00 : f32
    %303 = vector.broadcast %cst_74 : f32 to vector<1x17xf32>
    %304 = arith.subf %303, %302 : vector<1x17xf32>
    %cst_75 = arith.constant 9.99999997E-7 : f32
    %305 = vector.broadcast %cst_75 : f32 to vector<1x17xf32>
    %306 = arith.addf %304, %305 : vector<1x17xf32>
    %307 = math.log %306 : vector<1x17xf32>
    %308 = arith.subf %301, %307 : vector<1x17xf32>
    %cst_76 = arith.constant dense<0.000000e+00> : vector<1xf32>
    %309 = vector.multi_reduction <add>, %308, %cst_76 [1] : vector<1x17xf32> to vector<1xf32>
    %310 = vector.shape_cast %309 : vector<1xf32> to vector<1x1xf32>
    %c0_77 = arith.constant 0 : index
    %c0_78 = arith.constant 0 : index
    %c0_79 = arith.constant 0 : index
    %311 = vector.load %arg15[%c0_77, %c0_78, %c0_79] : memref<1x1x1xf32, #tpu.memory_space<vmem>>, vector<1x1x1xf32>
    %312 = vector.shape_cast %311 : vector<1x1x1xf32> to vector<1x1xf32>
    %313 = vector.shape_cast %310 : vector<1x1xf32> to vector<1x1x1xf32>
    tpu.vector_store %arg15[%c0_77, %c0_78, %c0_79], %313 {strides = array<i32>} : memref<1x1x1xf32, #tpu.memory_space<vmem>>, vector<1x1x1xf32>,
    %cst_80 = arith.constant 1.000000e+00 : f32
    %314 = vector.broadcast %cst_80 : f32 to vector<1x17xf32>
    %315 = arith.addf %295, %314 : vector<1x17xf32>
    %cst_81 = arith.constant dense<0.000000e+00> : vector<1xf32>
    %316 = vector.multi_reduction <add>, %315, %cst_81 [1] : vector<1x17xf32> to vector<1xf32>
    %317 = vector.shape_cast %316 : vector<1xf32> to vector<1x1xf32>
    %318 = tpu.reciprocal %317 {approx = true} : vector<1x1xf32> -> vector<1x1xf32>
    %319 = vector.broadcast %318 : vector<1x1xf32> to vector<1x17xf32>
    %320 = arith.mulf %315, %319 : vector<1x17xf32>
    %c0_82 = arith.constant 0 : index
    %c0_83 = arith.constant 0 : index
    %c0_84 = arith.constant 0 : index
    %321 = vector.load %arg14[%c0_82, %c0_83, %c0_84] : memref<1x1x17xf32, #tpu.memory_space<vmem>>, vector<1x1x17xf32>
    %322 = vector.shape_cast %321 : vector<1x1x17xf32> to vector<1x17xf32>
    %323 = vector.shape_cast %320 : vector<1x17xf32> to vector<1x1x17xf32>
    tpu.vector_store %arg14[%c0_82, %c0_83, %c0_84], %323 {strides = array<i32>} : memref<1x1x17xf32, #tpu.memory_space<vmem>>, vector<1x1x17xf32>,
    return
  }
  func.func @transform_0(%arg0: i32) -> (i32, i32, i32) {
    %c0_i32 = arith.constant 0 : i32
    %c0_i32_0 = arith.constant 0 : i32
    %c0_i32_1 = arith.constant 0 : i32
    return %arg0, %c0_i32, %c0_i32_0 : i32, i32, i32
  }
  func.func @transform_1(%arg0: i32) -> (i32, i32, i32) {
    %c0_i32 = arith.constant 0 : i32
    %c0_i32_0 = arith.constant 0 : i32
    %c0_i32_1 = arith.constant 0 : i32
    return %arg0, %c0_i32, %c0_i32_0 : i32, i32, i32
  }
  func.func @transform_2(%arg0: i32) -> (i32, i32, i32) {
    %c0_i32 = arith.constant 0 : i32
    %c0_i32_0 = arith.constant 0 : i32
    %c0_i32_1 = arith.constant 0 : i32
    return %arg0, %c0_i32, %c0_i32_0 : i32, i32, i32
  }
  func.func @transform_3(%arg0: i32) -> (i32, i32) {
    %c0_i32 = arith.constant 0 : i32
    %c0_i32_0 = arith.constant 0 : i32
    %c0_i32_1 = arith.constant 0 : i32
    return %c0_i32, %c0_i32_0 : i32, i32
  }
  func.func @transform_4(%arg0: i32) -> (i32, i32) {
    %c0_i32 = arith.constant 0 : i32
    %c0_i32_0 = arith.constant 0 : i32
    %c0_i32_1 = arith.constant 0 : i32
    return %c0_i32, %c0_i32_0 : i32, i32
  }
  func.func @transform_5(%arg0: i32) -> (i32, i32) {
    %c0_i32 = arith.constant 0 : i32
    %c0_i32_0 = arith.constant 0 : i32
    %c0_i32_1 = arith.constant 0 : i32
    return %c0_i32, %c0_i32_0 : i32, i32
  }
  func.func @transform_6(%arg0: i32) -> (i32, i32) {
    %c0_i32 = arith.constant 0 : i32
    %c0_i32_0 = arith.constant 0 : i32
    %c0_i32_1 = arith.constant 0 : i32
    return %c0_i32, %c0_i32_0 : i32, i32
  }
  func.func @transform_7(%arg0: i32) -> (i32, i32) {
    %c0_i32 = arith.constant 0 : i32
    %c0_i32_0 = arith.constant 0 : i32
    %c0_i32_1 = arith.constant 0 : i32
    return %c0_i32, %c0_i32_0 : i32, i32
  }
  func.func @transform_8(%arg0: i32) -> (i32, i32) {
    %c0_i32 = arith.constant 0 : i32
    %c0_i32_0 = arith.constant 0 : i32
    %c0_i32_1 = arith.constant 0 : i32
    return %c0_i32, %c0_i32_0 : i32, i32
  }
  func.func @transform_9(%arg0: i32) -> (i32, i32) {
    %c0_i32 = arith.constant 0 : i32
    %c0_i32_0 = arith.constant 0 : i32
    %c0_i32_1 = arith.constant 0 : i32
    return %c0_i32, %c0_i32_0 : i32, i32
  }
  func.func @transform_10(%arg0: i32) -> (i32, i32) {
    %c0_i32 = arith.constant 0 : i32
    %c0_i32_0 = arith.constant 0 : i32
    %c0_i32_1 = arith.constant 0 : i32
    return %c0_i32, %c0_i32_0 : i32, i32
  }
  func.func @transform_11(%arg0: i32) -> (i32, i32) {
    %c0_i32 = arith.constant 0 : i32
    %c0_i32_0 = arith.constant 0 : i32
    %c0_i32_1 = arith.constant 0 : i32
    return %c0_i32, %c0_i32_0 : i32, i32
  }
  func.func @transform_12(%arg0: i32) -> (i32, i32) {
    %c0_i32 = arith.constant 0 : i32
    %c0_i32_0 = arith.constant 0 : i32
    %c0_i32_1 = arith.constant 0 : i32
    return %c0_i32, %c0_i32_0 : i32, i32
  }
  func.func @transform_13(%arg0: i32) -> (i32, i32, i32) {
    %c0_i32 = arith.constant 0 : i32
    %c0_i32_0 = arith.constant 0 : i32
    %c0_i32_1 = arith.constant 0 : i32
    return %arg0, %c0_i32, %c0_i32_0 : i32, i32, i32
  }
  func.func @transform_14(%arg0: i32) -> (i32, i32, i32) {
    %c0_i32 = arith.constant 0 : i32
    %c0_i32_0 = arith.constant 0 : i32
    %c0_i32_1 = arith.constant 0 : i32
    return %arg0, %c0_i32, %c0_i32_0 : i32, i32, i32
  }
}

</mosaic_0001>

<llo_original>
// kernel: tpu_custom_call.1
$region0: #{tpu_custom_call.1}
  #allocation0 [shape = 'u32[]', space=smem, size = 0x4, offset = 0x4, fixed_abs, tag = 'smem constant byte address 0x4 - core index']
  #allocation1 [shape = 'u32[72,128]{1,0:T(1,128)}', space=vmem, size = 0x9000, scoped, tag = 'internal scratch']
  #allocation2 [shape = 'f32[1,1]{1,0:T(1,128)S(1)}', space=vmem, size = 0x200, scoped, tag = 'scoped memory for tpu_custom_call.1']
  %s0 = inlined_call_operand.vmem [shape: f32[2,48,16], index: 0, kind: input, shape index: {}]
  %s1 = inlined_call_operand.vmem [shape: f32[2,1,17], index: 1, kind: input, shape index: {}]
  %s2 = inlined_call_operand.vmem [shape: f32[2,1,17], index: 2, kind: input, shape index: {}]
  %s3 = inlined_call_operand.vmem [shape: bf16[80,144], index: 3, kind: input, shape index: {}]
  %s4 = inlined_call_operand.vmem [shape: f32[80,1], index: 4, kind: input, shape index: {}]
  %s5 = inlined_call_operand.vmem [shape: bf16[8,240], index: 5, kind: input, shape index: {}]
  %s6 = inlined_call_operand.<no memory space> [shape: f32[1,1], index: 6, kind: input, shape index: {}]
  %s7 = inlined_call_operand.vmem [shape: f32[12,51], index: 7, kind: input, shape index: {}]
  %s8 = inlined_call_operand.vmem [shape: f32[1,51], index: 8, kind: input, shape index: {}]
  %s9 = inlined_call_operand.vmem [shape: f32[17,51], index: 9, kind: input, shape index: {}]
  %s10 = inlined_call_operand.vmem [shape: f32[1,51], index: 10, kind: input, shape index: {}]
  %s11 = inlined_call_operand.vmem [shape: f32[34,34], index: 11, kind: input, shape index: {}]
  %s12 = inlined_call_operand.vmem [shape: f32[1,34], index: 12, kind: input, shape index: {}]
  %s13 = inlined_call_operand.hbm [shape: f32[2,1,17], index: 13, kind: output, shape index: {0}]
  %s14 = inlined_call_operand.vmem [shape: f32[2,1,1], index: 14, kind: output, shape index: {1}]
  %15 = xla_tuple %s13, %s14
  %s16 = sld [smem:[#allocation0]]
  $region93: #{tpu_custom_call.1} parent=0
    _
  %s18 = ssub.s32 1, %s16
  %s19 = scalar_select 0, %s18, %s16
  %v20 = vstv %s6
  %21 = vst [vmem:[#allocation2] sm:$0x1] %v20
  $region1: #{tpu_custom_call.1} parent=0
    #allocation3 [shape = 'u8[1024]{0}', space=vmem, size = 0x400, scoped, tag = 'output window, operand 0']
    #allocation4 [shape = 's32[2]{0}', space=sflag, size = 0x8, scoped, tag = 'scoped memory for tpu_custom_call.1']
    %22 = vsyncpa [#allocation4], 0
    %s23 = scalar_lea.sflag [#allocation4], 1
    %24 = vsyncpa %s23, 0
    loop: start=0, step=1, limit=4
    $region2: #{tpu_custom_call.1} parent=1 // loop_pre_header
      _
    $region3: #{tpu_custom_call.1} parent=1 // loop_header
      %s26 = sphi 0, %s30
      %p27 = scmp.ge.s32.totalorder %s26, 4
      %s36 = sphi 0, %s38
      %s39 = sphi 0, %s36
      %s40 = sphi 0, %s39
      %s56 = sphi 0, %s40
      %s62 = sphi 0, %s64
      %s65 = sphi 0, %s62
      %s66 = sphi 0, %s65
      %s82 = sphi 0, %s66
      %s88 = sphi 0, %s90
      %s91 = sphi 0, %s88
      %s92 = sphi 0, %s91
      %s108 = sphi 0, %s92
      %s112 = sphi 0, %s112
      %s114 = sphi 0, %s112
      %s115 = sphi 0, %s114
      %s129 = sphi 0, %s115
      %s133 = sphi 0, %s133
      %s135 = sphi 0, %s133
      %s136 = sphi 0, %s135
      %s150 = sphi 0, %s136
      %s154 = sphi 0, %s154
      %s156 = sphi 0, %s154
      %s157 = sphi 0, %s156
      %s171 = sphi 0, %s157
      %s175 = sphi 0, %s175
      %s177 = sphi 0, %s175
      %s178 = sphi 0, %s177
      %s192 = sphi 0, %s178
      %s196 = sphi 0, %s196
      %s198 = sphi 0, %s196
      %s199 = sphi 0, %s198
      %s213 = sphi 0, %s199
      %s217 = sphi 0, %s217
      %s219 = sphi 0, %s217
      %s220 = sphi 0, %s219
      %s234 = sphi 0, %s220
      %s238 = sphi 0, %s238
      %s240 = sphi 0, %s238
      %s241 = sphi 0, %s240
      %s255 = sphi 0, %s241
      %s259 = sphi 0, %s259
      %s261 = sphi 0, %s259
      %s262 = sphi 0, %s261
      %s276 = sphi 0, %s262
      %s280 = sphi 0, %s280
      %s282 = sphi 0, %s280
      %s283 = sphi 0, %s282
      %s297 = sphi 0, %s283
      %s301 = sphi 0, %s301
      %s303 = sphi 0, %s301
      %s304 = sphi 0, %s303
      %s318 = sphi 0, %s304
      %s324 = sphi 0, %s326
      %s327 = sphi 0, %s324
      %s328 = sphi 0, %s327
      %s344 = sphi 0, %s328
      %s350 = sphi 0, %s352
      %s353 = sphi 0, %s350
      %s354 = sphi 0, %s353
      %s370 = sphi 0, %s354
    $region4: #{tpu_custom_call.1} parent=1 // loop_header_branch
      %29 = sbr.rel (%p27) target = $region8
    $region5: #{tpu_custom_call.1} parent=1 // loop_body
      %s31 = ssub.s32 %s26, 1
      %s32 = ssub.s32 %s26, 2
      %s33 = sadd.s32 %s26, 1
      %s34 = ssub.s32 %s26, %s33
      %p35 = scmp.eq.s32.totalorder %s34, 0
      %s37 = sadd.s32 %s36, 1
      %s38 = scalar_select %p35, %s36, %s37
      %p41 = pneg %p35
      %p42 = scmp.eq.s32.totalorder %s26, 1
      %p43 = por %p41, %p42
      %p44 = scmp.ne.s32.totalorder %s36, %s39
      %p45 = scmp.eq.s32.totalorder %s26, 0
      %p46 = por %p44, %p45
      %p47 = scmp.ne.s32.totalorder %s36, %s39
      %p48 = scmp.eq.s32.totalorder %s31, 1
      %p49 = por %p47, %p48
      %p50 = scmp.ne.s32.totalorder %s39, %s40
      %p51 = scmp.eq.s32.totalorder %s31, 0
      %p52 = por %p50, %p51
      %p53 = scmp.ne.s32.totalorder %s39, %s40
      %p54 = scmp.eq.s32.totalorder %s32, 1
      %p55 = por %p53, %p54
      %p57 = scmp.ne.s32.totalorder %s40, %s56
      %p58 = scmp.eq.s32.totalorder %s32, 0
      %p59 = por %p57, %p58
      %s60 = ssub.s32 %s26, %s33
      %p61 = scmp.eq.s32.totalorder %s60, 0
      %s63 = sadd.s32 %s62, 1
      %s64 = scalar_select %p61, %s62, %s63
      %p67 = pneg %p61
      %p68 = scmp.eq.s32.totalorder %s26, 1
      %p69 = por %p67, %p68
      %p70 = scmp.ne.s32.totalorder %s62, %s65
      %p71 = scmp.eq.s32.totalorder %s26, 0
      %p72 = por %p70, %p71
      %p73 = scmp.ne.s32.totalorder %s62, %s65
      %p74 = scmp.eq.s32.totalorder %s31, 1
      %p75 = por %p73, %p74
      %p76 = scmp.ne.s32.totalorder %s65, %s66
      %p77 = scmp.eq.s32.totalorder %s31, 0
      %p78 = por %p76, %p77
      %p79 = scmp.ne.s32.totalorder %s65, %s66
      %p80 = scmp.eq.s32.totalorder %s32, 1
      %p81 = por %p79, %p80
      %p83 = scmp.ne.s32.totalorder %s66, %s82
      %p84 = scmp.eq.s32.totalorder %s32, 0
      %p85 = por %p83, %p84
      %s86 = ssub.s32 %s26, %s33
      %p87 = scmp.eq.s32.totalorder %s86, 0
      %s89 = sadd.s32 %s88, 1
      %s90 = scalar_select %p87, %s88, %s89
      %p93 = pneg %p87
      %p94 = scmp.eq.s32.totalorder %s26, 1
      %p95 = por %p93, %p94
      %p96 = scmp.ne.s32.totalorder %s88, %s91
      %p97 = scmp.eq.s32.totalorder %s26, 0
      %p98 = por %p96, %p97
      %p99 = scmp.ne.s32.totalorder %s88, %s91
      %p100 = scmp.eq.s32.totalorder %s31, 1
      %p101 = por %p99, %p100
      %p102 = scmp.ne.s32.totalorder %s91, %s92
      %p103 = scmp.eq.s32.totalorder %s31, 0
      %p104 = por %p102, %p103
      %p105 = scmp.ne.s32.totalorder %s91, %s92
      %p106 = scmp.eq.s32.totalorder %s32, 1
      %p107 = por %p105, %p106
      %p109 = scmp.ne.s32.totalorder %s92, %s108
      %p110 = scmp.eq.s32.totalorder %s32, 0
      %p111 = por %p109, %p110
      %s113 = sadd.s32 %s112, 1
      %p116 = scmp.eq.s32.totalorder %s26, 1
      %p117 = scmp.ne.s32.totalorder %s112, %s114
      %p118 = scmp.eq.s32.totalorder %s26, 0
      %p119 = por %p117, %p118
      %p120 = scmp.ne.s32.totalorder %s112, %s114
      %p121 = scmp.eq.s32.totalorder %s31, 1
      %p122 = por %p120, %p121
      %p123 = scmp.ne.s32.totalorder %s114, %s115
      %p124 = scmp.eq.s32.totalorder %s31, 0
      %p125 = por %p123, %p124
      %p126 = scmp.ne.s32.totalorder %s114, %s115
      %p127 = scmp.eq.s32.totalorder %s32, 1
      %p128 = por %p126, %p127
      %p130 = scmp.ne.s32.totalorder %s115, %s129
      %p131 = scmp.eq.s32.totalorder %s32, 0
      %p132 = por %p130, %p131
      %s134 = sadd.s32 %s133, 1
      %p137 = scmp.eq.s32.totalorder %s26, 1
      %p138 = scmp.ne.s32.totalorder %s133, %s135
      %p139 = scmp.eq.s32.totalorder %s26, 0
      %p140 = por %p138, %p139
      %p141 = scmp.ne.s32.totalorder %s133, %s135
      %p142 = scmp.eq.s32.totalorder %s31, 1
      %p143 = por %p141, %p142
      %p144 = scmp.ne.s32.totalorder %s135, %s136
      %p145 = scmp.eq.s32.totalorder %s31, 0
      %p146 = por %p144, %p145
      %p147 = scmp.ne.s32.totalorder %s135, %s136
      %p148 = scmp.eq.s32.totalorder %s32, 1
      %p149 = por %p147, %p148
      %p151 = scmp.ne.s32.totalorder %s136, %s150
      %p152 = scmp.eq.s32.totalorder %s32, 0
      %p153 = por %p151, %p152
      %s155 = sadd.s32 %s154, 1
      %p158 = scmp.eq.s32.totalorder %s26, 1
      %p159 = scmp.ne.s32.totalorder %s154, %s156
      %p160 = scmp.eq.s32.totalorder %s26, 0
      %p161 = por %p159, %p160
      %p162 = scmp.ne.s32.totalorder %s154, %s156
      %p163 = scmp.eq.s32.totalorder %s31, 1
      %p164 = por %p162, %p163
      %p165 = scmp.ne.s32.totalorder %s156, %s157
      %p166 = scmp.eq.s32.totalorder %s31, 0
      %p167 = por %p165, %p166
      %p168 = scmp.ne.s32.totalorder %s156, %s157
      %p169 = scmp.eq.s32.totalorder %s32, 1
      %p170 = por %p168, %p169
      %p172 = scmp.ne.s32.totalorder %s157, %s171
      %p173 = scmp.eq.s32.totalorder %s32, 0
      %p174 = por %p172, %p173
      %s176 = sadd.s32 %s175, 1
      %p179 = scmp.eq.s32.totalorder %s26, 1
      %p180 = scmp.ne.s32.totalorder %s175, %s177
      %p181 = scmp.eq.s32.totalorder %s26, 0
      %p182 = por %p180, %p181
      %p183 = scmp.ne.s32.totalorder %s175, %s177
      %p184 = scmp.eq.s32.totalorder %s31, 1
      %p185 = por %p183, %p184
      %p186 = scmp.ne.s32.totalorder %s177, %s178
      %p187 = scmp.eq.s32.totalorder %s31, 0
      %p188 = por %p186, %p187
      %p189 = scmp.ne.s32.totalorder %s177, %s178
      %p190 = scmp.eq.s32.totalorder %s32, 1
      %p191 = por %p189, %p190
      %p193 = scmp.ne.s32.totalorder %s178, %s192
      %p194 = scmp.eq.s32.totalorder %s32, 0
      %p195 = por %p193, %p194
      %s197 = sadd.s32 %s196, 1
      %p200 = scmp.eq.s32.totalorder %s26, 1
      %p201 = scmp.ne.s32.totalorder %s196, %s198
      %p202 = scmp.eq.s32.totalorder %s26, 0
      %p203 = por %p201, %p202
      %p204 = scmp.ne.s32.totalorder %s196, %s198
      %p205 = scmp.eq.s32.totalorder %s31, 1
      %p206 = por %p204, %p205
      %p207 = scmp.ne.s32.totalorder %s198, %s199
      %p208 = scmp.eq.s32.totalorder %s31, 0
      %p209 = por %p207, %p208
      %p210 = scmp.ne.s32.totalorder %s198, %s199
      %p211 = scmp.eq.s32.totalorder %s32, 1
      %p212 = por %p210, %p211
      %p214 = scmp.ne.s32.totalorder %s199, %s213
      %p215 = scmp.eq.s32.totalorder %s32, 0
      %p216 = por %p214, %p215
      %s218 = sadd.s32 %s217, 1
      %p221 = scmp.eq.s32.totalorder %s26, 1
      %p222 = scmp.ne.s32.totalorder %s217, %s219
      %p223 = scmp.eq.s32.totalorder %s26, 0
      %p224 = por %p222, %p223
      %p225 = scmp.ne.s32.totalorder %s217, %s219
      %p226 = scmp.eq.s32.totalorder %s31, 1
      %p227 = por %p225, %p226
      %p228 = scmp.ne.s32.totalorder %s219, %s220
      %p229 = scmp.eq.s32.totalorder %s31, 0
      %p230 = por %p228, %p229
      %p231 = scmp.ne.s32.totalorder %s219, %s220
      %p232 = scmp.eq.s32.totalorder %s32, 1
      %p233 = por %p231, %p232
      %p235 = scmp.ne.s32.totalorder %s220, %s234
      %p236 = scmp.eq.s32.totalorder %s32, 0
      %p237 = por %p235, %p236
      %s239 = sadd.s32 %s238, 1
      %p242 = scmp.eq.s32.totalorder %s26, 1
      %p243 = scmp.ne.s32.totalorder %s238, %s240
      %p244 = scmp.eq.s32.totalorder %s26, 0
      %p245 = por %p243, %p244
      %p246 = scmp.ne.s32.totalorder %s238, %s240
      %p247 = scmp.eq.s32.totalorder %s31, 1
      %p248 = por %p246, %p247
      %p249 = scmp.ne.s32.totalorder %s240, %s241
      %p250 = scmp.eq.s32.totalorder %s31, 0
      %p251 = por %p249, %p250
      %p252 = scmp.ne.s32.totalorder %s240, %s241
      %p253 = scmp.eq.s32.totalorder %s32, 1
      %p254 = por %p252, %p253
      %p256 = scmp.ne.s32.totalorder %s241, %s255
      %p257 = scmp.eq.s32.totalorder %s32, 0
      %p258 = por %p256, %p257
      %s260 = sadd.s32 %s259, 1
      %p263 = scmp.eq.s32.totalorder %s26, 1
      %p264 = scmp.ne.s32.totalorder %s259, %s261
      %p265 = scmp.eq.s32.totalorder %s26, 0
      %p266 = por %p264, %p265
      %p267 = scmp.ne.s32.totalorder %s259, %s261
      %p268 = scmp.eq.s32.totalorder %s31, 1
      %p269 = por %p267, %p268
      %p270 = scmp.ne.s32.totalorder %s261, %s262
      %p271 = scmp.eq.s32.totalorder %s31, 0
      %p272 = por %p270, %p271
      %p273 = scmp.ne.s32.totalorder %s261, %s262
      %p274 = scmp.eq.s32.totalorder %s32, 1
      %p275 = por %p273, %p274
      %p277 = scmp.ne.s32.totalorder %s262, %s276
      %p278 = scmp.eq.s32.totalorder %s32, 0
      %p279 = por %p277, %p278
      %s281 = sadd.s32 %s280, 1
      %p284 = scmp.eq.s32.totalorder %s26, 1
      %p285 = scmp.ne.s32.totalorder %s280, %s282
      %p286 = scmp.eq.s32.totalorder %s26, 0
      %p287 = por %p285, %p286
      %p288 = scmp.ne.s32.totalorder %s280, %s282
      %p289 = scmp.eq.s32.totalorder %s31, 1
      %p290 = por %p288, %p289
      %p291 = scmp.ne.s32.totalorder %s282, %s283
      %p292 = scmp.eq.s32.totalorder %s31, 0
      %p293 = por %p291, %p292
      %p294 = scmp.ne.s32.totalorder %s282, %s283
      %p295 = scmp.eq.s32.totalorder %s32, 1
      %p296 = por %p294, %p295
      %p298 = scmp.ne.s32.totalorder %s283, %s297
      %p299 = scmp.eq.s32.totalorder %s32, 0
      %p300 = por %p298, %p299
      %s302 = sadd.s32 %s301, 1
      %p305 = scmp.eq.s32.totalorder %s26, 1
      %p306 = scmp.ne.s32.totalorder %s301, %s303
      %p307 = scmp.eq.s32.totalorder %s26, 0
      %p308 = por %p306, %p307
      %p309 = scmp.ne.s32.totalorder %s301, %s303
      %p310 = scmp.eq.s32.totalorder %s31, 1
      %p311 = por %p309, %p310
      %p312 = scmp.ne.s32.totalorder %s303, %s304
      %p313 = scmp.eq.s32.totalorder %s31, 0
      %p314 = por %p312, %p313
      %p315 = scmp.ne.s32.totalorder %s303, %s304
      %p316 = scmp.eq.s32.totalorder %s32, 1
      %p317 = por %p315, %p316
      %p319 = scmp.ne.s32.totalorder %s304, %s318
      %p320 = scmp.eq.s32.totalorder %s32, 0
      %p321 = por %p319, %p320
      %s322 = ssub.s32 %s26, %s33
      %p323 = scmp.eq.s32.totalorder %s322, 0
      %s325 = sadd.s32 %s324, 1
      %s326 = scalar_select %p323, %s324, %s325
      %p329 = pneg %p323
      %p330 = scmp.eq.s32.totalorder %s26, 1
      %p331 = por %p329, %p330
      %p332 = scmp.ne.s32.totalorder %s324, %s327
      %p333 = scmp.eq.s32.totalorder %s26, 0
      %p334 = por %p332, %p333
      %p335 = scmp.ne.s32.totalorder %s324, %s327
      %p336 = scmp.eq.s32.totalorder %s31, 1
      %p337 = por %p335, %p336
      %p338 = scmp.ne.s32.totalorder %s327, %s328
      %p339 = scmp.eq.s32.totalorder %s31, 0
      %p340 = por %p338, %p339
      %p341 = scmp.ne.s32.totalorder %s327, %s328
      %p342 = scmp.eq.s32.totalorder %s32, 1
      %p343 = por %p341, %p342
      %p345 = scmp.ne.s32.totalorder %s328, %s344
      %p346 = scmp.eq.s32.totalorder %s32, 0
      %p347 = por %p345, %p346
      %s348 = ssub.s32 %s26, %s33
      %p349 = scmp.eq.s32.totalorder %s348, 0
      %s351 = sadd.s32 %s350, 1
      %s352 = scalar_select %p349, %s350, %s351
      %p355 = pneg %p349
      %p356 = scmp.eq.s32.totalorder %s26, 1
      %p357 = por %p355, %p356
      %p358 = scmp.ne.s32.totalorder %s350, %s353
      %p359 = scmp.eq.s32.totalorder %s26, 0
      %p360 = por %p358, %p359
      %p361 = scmp.ne.s32.totalorder %s350, %s353
      %p362 = scmp.eq.s32.totalorder %s31, 1
      %p363 = por %p361, %p362
      %p364 = scmp.ne.s32.totalorder %s353, %s354
      %p365 = scmp.eq.s32.totalorder %s31, 0
      %p366 = por %p364, %p365
      %p367 = scmp.ne.s32.totalorder %s353, %s354
      %p368 = scmp.eq.s32.totalorder %s32, 1
      %p369 = por %p367, %p368
      %p371 = scmp.ne.s32.totalorder %s354, %s370
      %p372 = scmp.eq.s32.totalorder %s32, 0
      %p373 = por %p371, %p372
      %p374 = scmp.le.s32.totalorder 1, %s26
      %p375 = scmp.lt.s32.totalorder %s26, 3
      %p376 = pnand %p374, %p375
      %p377 = pneg %p376
      // Predicated region
      $region9: #{tpu_custom_call.1} parent=5 // pred_check
        _
      $region10: #{tpu_custom_call.1} parent=5 // pred_check_branch
        %379 = sbr.rel (%p376) target = $region12
      $region11: #{tpu_custom_call.1} parent=5 // pred_region
        %s380 = ssub.s32 %s26, 1
        // Predicated region
        $region13: #{tpu_custom_call.1} parent=11 // pred_check
          %p381 = pneg %p125
        $region14: #{tpu_custom_call.1} parent=11 // pred_check_branch
          %383 = sbr.rel (%p381) target = $region16
        $region15: #{tpu_custom_call.1} parent=11 // pred_region
          _
        $region16: #{tpu_custom_call.1} parent=11 // pred_fallthru
          _
        // Predicated region
        $region17: #{tpu_custom_call.1} parent=11 // pred_check
          %p384 = pneg %p146
        $region18: #{tpu_custom_call.1} parent=11 // pred_check_branch
          %386 = sbr.rel (%p384) target = $region20
        $region19: #{tpu_custom_call.1} parent=11 // pred_region
          _
        $region20: #{tpu_custom_call.1} parent=11 // pred_fallthru
          _
        // Predicated region
        $region21: #{tpu_custom_call.1} parent=11 // pred_check
          %p387 = pneg %p167
        $region22: #{tpu_custom_call.1} parent=11 // pred_check_branch
          %389 = sbr.rel (%p387) target = $region24
        $region23: #{tpu_custom_call.1} parent=11 // pred_region
          _
        $region24: #{tpu_custom_call.1} parent=11 // pred_fallthru
          _
        // Predicated region
        $region25: #{tpu_custom_call.1} parent=11 // pred_check
          %p390 = pneg %p188
        $region26: #{tpu_custom_call.1} parent=11 // pred_check_branch
          %392 = sbr.rel (%p390) target = $region28
        $region27: #{tpu_custom_call.1} parent=11 // pred_region
          _
        $region28: #{tpu_custom_call.1} parent=11 // pred_fallthru
          _
        // Predicated region
        $region29: #{tpu_custom_call.1} parent=11 // pred_check
          %p393 = pneg %p209
        $region30: #{tpu_custom_call.1} parent=11 // pred_check_branch
          %395 = sbr.rel (%p393) target = $region32
        $region31: #{tpu_custom_call.1} parent=11 // pred_region
          _
        $region32: #{tpu_custom_call.1} parent=11 // pred_fallthru
          _
        // Predicated region
        $region33: #{tpu_custom_call.1} parent=11 // pred_check
          %p396 = pneg %p230
        $region34: #{tpu_custom_call.1} parent=11 // pred_check_branch
          %398 = sbr.rel (%p396) target = $region36
        $region35: #{tpu_custom_call.1} parent=11 // pred_region
          _
        $region36: #{tpu_custom_call.1} parent=11 // pred_fallthru
          _
        // Predicated region
        $region37: #{tpu_custom_call.1} parent=11 // pred_check
          %p399 = pneg %p251
        $region38: #{tpu_custom_call.1} parent=11 // pred_check_branch
          %401 = sbr.rel (%p399) target = $region40
        $region39: #{tpu_custom_call.1} parent=11 // pred_region
          _
        $region40: #{tpu_custom_call.1} parent=11 // pred_fallthru
          _
        // Predicated region
        $region41: #{tpu_custom_call.1} parent=11 // pred_check
          %p402 = pneg %p272
        $region42: #{tpu_custom_call.1} parent=11 // pred_check_branch
          %404 = sbr.rel (%p402) target = $region44
        $region43: #{tpu_custom_call.1} parent=11 // pred_region
          _
        $region44: #{tpu_custom_call.1} parent=11 // pred_fallthru
          _
        // Predicated region
        $region45: #{tpu_custom_call.1} parent=11 // pred_check
          %p405 = pneg %p293
        $region46: #{tpu_custom_call.1} parent=11 // pred_check_branch
          %407 = sbr.rel (%p405) target = $region48
        $region47: #{tpu_custom_call.1} parent=11 // pred_region
          _
        $region48: #{tpu_custom_call.1} parent=11 // pred_fallthru
          _
        // Predicated region
        $region49: #{tpu_custom_call.1} parent=11 // pred_check
          %p408 = pneg %p314
        $region50: #{tpu_custom_call.1} parent=11 // pred_check_branch
          %410 = sbr.rel (%p408) target = $region52
        $region51: #{tpu_custom_call.1} parent=11 // pred_region
          _
        $region52: #{tpu_custom_call.1} parent=11 // pred_fallthru
          _
      $region12: #{tpu_custom_call.1} parent=5 // pred_fallthru
        _
      %p411 = scmp.lt.s32.totalorder %s26, 2
      // Predicated region
      $region53: #{tpu_custom_call.1} parent=5 // pred_check
        %p412 = pneg %p411
      $region54: #{tpu_custom_call.1} parent=5 // pred_check_branch
        %414 = sbr.rel (%p412) target = $region56
      $region55: #{tpu_custom_call.1} parent=5 // pred_region
        // Predicated region
        $region57: #{tpu_custom_call.1} parent=55 // pred_check
          %p415 = pneg %p46
        $region58: #{tpu_custom_call.1} parent=55 // pred_check_branch
          %417 = sbr.rel (%p415) target = $region60
        $region59: #{tpu_custom_call.1} parent=55 // pred_region
          %p418 = scmp.lt.s32.totalorder %s26, 1
          %s419 = scalar_select %p418, %s26, 1
          %s420 = smul.addr %s419, 6
          %s421 = smul.addr %s420, 8
          %s422 = scalar_lea.vmem %s0, %s421
        $region60: #{tpu_custom_call.1} parent=55 // pred_fallthru
          _
        // Predicated region
        $region61: #{tpu_custom_call.1} parent=55 // pred_check
          %p423 = pneg %p72
        $region62: #{tpu_custom_call.1} parent=55 // pred_check_branch
          %425 = sbr.rel (%p423) target = $region64
        $region63: #{tpu_custom_call.1} parent=55 // pred_region
          %p426 = scmp.lt.s32.totalorder %s26, 1
          %s427 = scalar_select %p426, %s26, 1
          %s428 = scalar_lea.vmem %s1, %s427
        $region64: #{tpu_custom_call.1} parent=55 // pred_fallthru
          _
        // Predicated region
        $region65: #{tpu_custom_call.1} parent=55 // pred_check
          %p429 = pneg %p98
        $region66: #{tpu_custom_call.1} parent=55 // pred_check_branch
          %431 = sbr.rel (%p429) target = $region68
        $region67: #{tpu_custom_call.1} parent=55 // pred_region
          %p432 = scmp.lt.s32.totalorder %s26, 1
          %s433 = scalar_select %p432, %s26, 1
          %s434 = scalar_lea.vmem %s2, %s433
        $region68: #{tpu_custom_call.1} parent=55 // pred_fallthru
          _
      $region56: #{tpu_custom_call.1} parent=5 // pred_fallthru
        _
      %p435 = scmp.le.s32.totalorder 1, %s26
      %p436 = scmp.lt.s32.totalorder %s26, 3
      %p437 = pnand %p435, %p436
      %p438 = pneg %p437
      // Predicated region
      $region69: #{tpu_custom_call.1} parent=5 // pred_check
        _
      $region70: #{tpu_custom_call.1} parent=5 // pred_check_branch
        %440 = sbr.rel (%p437) target = $region72
      $region71: #{tpu_custom_call.1} parent=5 // pred_region
        %s441 = ssub.s32 %s26, 1
        %p442 = scmp.lt.s32.totalorder %s31, 1
        %s443 = scalar_select %p442, %s31, 1
        %s444 = smul.addr %s443, 6
        %s445 = smul.addr %s444, 8
        %s446 = scalar_lea.vmem %s0, %s445
        %p447 = pneg %p52
        %p448 = pneg %p49
        %p449 = scmp.lt.s32.totalorder %s31, 1
        %s450 = scalar_select %p449, %s31, 1
        %s451 = scalar_lea.vmem %s1, %s450
        %p452 = pneg %p78
        %p453 = pneg %p75
        %p454 = scmp.lt.s32.totalorder %s31, 1
        %s455 = scalar_select %p454, %s31, 1
        %s456 = scalar_lea.vmem %s2, %s455
        %p457 = pneg %p104
        %p458 = pneg %p101
        %p459 = pneg %p125
        %p460 = pneg %p122
        %p461 = pneg %p146
        %p462 = pneg %p143
        %p463 = pneg %p167
        %p464 = pneg %p164
        %p465 = pneg %p188
        %p466 = pneg %p185
        %p467 = pneg %p209
        %p468 = pneg %p206
        %p469 = pneg %p230
        %p470 = pneg %p227
        %p471 = pneg %p251
        %p472 = pneg %p248
        %p473 = pneg %p272
        %p474 = pneg %p269
        %p475 = pneg %p293
        %p476 = pneg %p290
        %p477 = pneg %p314
        %p478 = pneg %p311
        %p479 = pneg %p340
        %p480 = pneg %p337
        %s481 = sand.u32 %s327, 1
        %s482 = scalar_lea.sflag [#allocation4], %s481
        %s483 = sand.u32 %s327, 1
        %s484 = scalar_lea.vmem [#allocation3], %s483
        %p485 = pneg %p366
        %p486 = pneg %p363
        %p487 = scmp.lt.s32.totalorder %s31, 1
        %s488 = scalar_select %p487, %s31, 1
        %s489 = scalar_lea.vmem %s14, %s488
        %p490 = scmp.lt.s32.totalorder %s31, 1
        %s491 = scalar_select %p490, %s31, 1
        %s492 = smul.addr %s491, 6
        %s493 = smul.addr %s492, 8
        %s494 = scalar_lea.vmem %s0, %s493
        %p495 = scmp.lt.s32.totalorder %s31, 1
        %s496 = scalar_select %p495, %s31, 1
        %s497 = scalar_lea.vmem %s1, %s496
        %p498 = scmp.lt.s32.totalorder %s31, 1
        %s499 = scalar_select %p498, %s31, 1
        %s500 = scalar_lea.vmem %s2, %s499
        %p501 = scmp.lt.s32.totalorder %s31, 1
        %s502 = scalar_select %p501, %s31, 1
        %s503 = scalar_lea.vmem %s14, %s502
        %v505 = vld [vmem:[%s494] sm:$0xff]
        %v506 = vld [vmem:[%s494 + $0x8] sm:$0xff]
        %v507 = vld [vmem:[%s494 + $0x10] sm:$0xff]
        %v508 = vld [vmem:[%s494 + $0x18] sm:$0xff]
        %v509 = vld [vmem:[%s494 + $0x20] sm:$0xff]
        %v510 = vld [vmem:[%s494 + $0x28] sm:$0xff]
        %v511 = vpack.c.bf16 %v505, %v505
        %v512 = vpack.c.bf16 %v506, %v506
        %v513 = vpack.c.bf16 %v507, %v507
        %v514 = vpack.c.bf16 %v508, %v508
        %v515 = vpack.c.bf16 %v509, %v509
        %v516 = vpack.c.bf16 %v510, %v510
        %v523 = vunpack.c.l.b16 %v511
        %v524 = vunpack.c.l.b16 %v512
        %v525 = vunpack.c.l.b16 %v513
        %v526 = vunpack.c.l.b16 %v514
        %v527 = vunpack.c.l.b16 %v515
        %v528 = vunpack.c.l.b16 %v516
        %v529 = vpack.c.b16 %v524, %v523
        %v530 = vpack.c.b16 %v526, %v525
        %v531 = vpack.c.b16 %v528, %v527
        %535 = vrot.lane.b32.xlu0 %v529, 127
        %v536 = vpop.permute.xlu0 %535
        %537 = vrot.lane.b32.xlu0 %v530, 127
        %v538 = vpop.permute.xlu0 %537
        %539 = vrot.lane.b32.xlu0 %v531, 127
        %v540 = vpop.permute.xlu0 %539
        %544 = vrot.lane.b32.xlu0 %v529, 126
        %v545 = vpop.permute.xlu0 %544
        %546 = vrot.lane.b32.xlu0 %v530, 126
        %v547 = vpop.permute.xlu0 %546
        %548 = vrot.lane.b32.xlu0 %v531, 126
        %v549 = vpop.permute.xlu0 %548
        %v553 = vld [vmem:[%s3] sm:$0xff]
        %v554 = vld [vmem:[%s3 + $0x8] sm:$0xff]
        %v555 = vld [vmem:[%s3 + $0x10] sm:$0xff]
        %v556 = vld [vmem:[%s3 + $0x18] sm:$0xff]
        %v557 = vld [vmem:[%s3 + $0x20] sm:$0xff]
        %v558 = vld [vmem:[%s3 + $0x28] sm:$0xff]
        %v559 = vld [vmem:[%s3 + $0x30] sm:$0xff]
        %v560 = vld [vmem:[%s3 + $0x38] sm:$0xff]
        %v561 = vld [vmem:[%s3 + $0x40] sm:$0xff]
        %v562 = vld [vmem:[%s3 + $0x48] sm:$0xff]
        %v563 = vld [vmem:[%s4] sm:$0xff]
        %v564 = vld [vmem:[%s4 + $0x8] sm:$0xff]
        %v565 = vld [vmem:[%s4 + $0x10] sm:$0xff]
        %v566 = vld [vmem:[%s4 + $0x18] sm:$0xff]
        %v567 = vld [vmem:[%s4 + $0x20] sm:$0xff]
        %v568 = vld [vmem:[%s4 + $0x28] sm:$0xff]
        %v569 = vld [vmem:[%s4 + $0x30] sm:$0xff]
        %v570 = vld [vmem:[%s4 + $0x38] sm:$0xff]
        %v571 = vld [vmem:[%s4 + $0x40] sm:$0xff]
        %v572 = vld [vmem:[%s4 + $0x48] sm:$0xff]
        %574 = vset.pattern.permute.xlu0 0
        %575 = vperm.xlu0 %574, %v563
        %v576 = vpop.permute.xlu0 %575
        %579 = vset.pattern.permute.xlu0 0
        %580 = vperm.xlu0 %579, %v564
        %v581 = vpop.permute.xlu0 %580
        %584 = vset.pattern.permute.xlu0 0
        %585 = vperm.xlu0 %584, %v565
        %v586 = vpop.permute.xlu0 %585
        %589 = vset.pattern.permute.xlu0 0
        %590 = vperm.xlu0 %589, %v566
        %v591 = vpop.permute.xlu0 %590
        %594 = vset.pattern.permute.xlu0 0
        %595 = vperm.xlu0 %594, %v567
        %v596 = vpop.permute.xlu0 %595
        %599 = vset.pattern.permute.xlu0 0
        %600 = vperm.xlu0 %599, %v568
        %v601 = vpop.permute.xlu0 %600
        %604 = vset.pattern.permute.xlu0 0
        %605 = vperm.xlu0 %604, %v569
        %v606 = vpop.permute.xlu0 %605
        %609 = vset.pattern.permute.xlu0 0
        %610 = vperm.xlu0 %609, %v570
        %v611 = vpop.permute.xlu0 %610
        %614 = vset.pattern.permute.xlu0 0
        %615 = vperm.xlu0 %614, %v571
        %v616 = vpop.permute.xlu0 %615
        %619 = vset.pattern.permute.xlu0 0
        %620 = vperm.xlu0 %619, %v572
        %v621 = vpop.permute.xlu0 %620
        %v633 = vunpack.c.l.b16 %v553
        %v634 = vunpack.c.h.b16 %v553
        %v635 = vunpack.c.l.b16 %v554
        %v636 = vunpack.c.h.b16 %v554
        %v637 = vunpack.c.l.b16 %v555
        %v638 = vunpack.c.h.b16 %v555
        %v639 = vunpack.c.l.b16 %v556
        %v640 = vunpack.c.h.b16 %v556
        %v641 = vunpack.c.l.b16 %v557
        %v642 = vunpack.c.h.b16 %v557
        %v643 = vunpack.c.l.b16 %v558
        %v644 = vunpack.c.h.b16 %v558
        %v645 = vunpack.c.l.b16 %v559
        %v646 = vunpack.c.h.b16 %v559
        %v647 = vunpack.c.l.b16 %v560
        %v648 = vunpack.c.h.b16 %v560
        %v649 = vunpack.c.l.b16 %v561
        %v650 = vunpack.c.h.b16 %v561
        %v651 = vunpack.c.l.b16 %v562
        %v652 = vunpack.c.h.b16 %v562
        %v653 = vpack.c.b16 %v635, %v633
        %v654 = vpack.c.b16 %v636, %v634
        %v655 = vpack.c.b16 %v639, %v637
        %v656 = vpack.c.b16 %v640, %v638
        %v657 = vpack.c.b16 %v643, %v641
        %v658 = vpack.c.b16 %v644, %v642
        %v659 = vpack.c.b16 %v647, %v645
        %v660 = vpack.c.b16 %v648, %v646
        %v661 = vpack.c.b16 %v651, %v649
        %v662 = vpack.c.b16 %v652, %v650
        %vm668 = vcmask 130048
        %v670 = vsel %vm668, %v654, 0
        %v673 = vsel %vm668, %v656, 0
        %v676 = vsel %vm668, %v658, 0
        %v679 = vsel %vm668, %v660, 0
        %v682 = vsel %vm668, %v662, 0
        %684 = vmatpush.bf16.msra.mxu0 %v547
        %685 = vmatpush.bf16.msra.mxu0 %v545
        %686 = vmatpush.bf16.msra.mxu0 %v540
        %687 = vmatpush.bf16.msra.mxu0 %v538
        %688 = vmatpush.bf16.msra.mxu0 %v536
        %689 = vmatpush.bf16.msra.mxu0 %v531
        %690 = vmatpush.bf16.msra.mxu0 %v530
        %691 = vmatpush.bf16.msra.mxu0 %v529
        %692 = vmatmul.bf16.gmra.mxu0 %v653
        %v693 = vpop.f32.mrf.mxu0
        %v694 = vadd.f32 %v576, %v693
        %v695 = vpop.f32.mrf.mxu0
        %v696 = vadd.f32 %v581, %v695
        %697 = vmatmul.bf16.gmra.mxu0 %v655
        %v698 = vpop.f32.mrf.mxu0
        %v699 = vadd.f32 %v586, %v698
        %v700 = vpop.f32.mrf.mxu0
        %v701 = vadd.f32 %v591, %v700
        %702 = vmatmul.bf16.gmra.mxu0 %v657
        %v703 = vpop.f32.mrf.mxu0
        %v704 = vadd.f32 %v596, %v703
        %v705 = vpop.f32.mrf.mxu0
        %v706 = vadd.f32 %v601, %v705
        %707 = vmatmul.bf16.gmra.mxu0 %v659
        %v708 = vpop.f32.mrf.mxu0
        %v709 = vadd.f32 %v606, %v708
        %v710 = vpop.f32.mrf.mxu0
        %v711 = vadd.f32 %v611, %v710
        %712 = vmatmul.bf16.gmra.mxu0 %v661
        %v713 = vpop.f32.mrf.mxu0
        %v714 = vadd.f32 %v616, %v713
        %v715 = vpop.f32.mrf.mxu0
        %v716 = vadd.f32 %v621, %v715
        %717 = vdwg.mxu0
        %718 = vmatpush.bf16.msra.mxu0 0
        %719 = vmatpush.bf16.msra.mxu0 0
        %720 = vmatpush.bf16.msra.mxu0 0
        %721 = vmatpush.bf16.msra.mxu0 0
        %722 = vmatpush.bf16.msra.mxu0 0
        %723 = vmatpush.bf16.msra.mxu0 0
        %724 = vmatpush.bf16.msra.mxu0 0
        %725 = vmatpush.bf16.msra.mxu0 %v549
        %726 = vmatmul.bf16.gmra.mxu0 %v670
        %v727 = vpop.f32.mrf.mxu0
        %v728 = vadd.f32 %v694, %v727
        %v729 = vpop.f32.mrf.mxu0
        %v730 = vadd.f32 %v696, %v729
        %731 = vmatmul.bf16.gmra.mxu0 %v673
        %v732 = vpop.f32.mrf.mxu0
        %v733 = vadd.f32 %v699, %v732
        %v734 = vpop.f32.mrf.mxu0
        %v735 = vadd.f32 %v701, %v734
        %736 = vmatmul.bf16.gmra.mxu0 %v676
        %v737 = vpop.f32.mrf.mxu0
        %v738 = vadd.f32 %v704, %v737
        %v739 = vpop.f32.mrf.mxu0
        %v740 = vadd.f32 %v706, %v739
        %741 = vmatmul.bf16.gmra.mxu0 %v679
        %v742 = vpop.f32.mrf.mxu0
        %v743 = vadd.f32 %v709, %v742
        %v744 = vpop.f32.mrf.mxu0
        %v745 = vadd.f32 %v711, %v744
        %746 = vmatmul.bf16.gmra.mxu0 %v682
        %v747 = vpop.f32.mrf.mxu0
        %v748 = vadd.f32 %v714, %v747
        %v749 = vpop.f32.mrf.mxu0
        %v750 = vadd.f32 %v716, %v749
        %751 = vdwg.mxu0
        %vm752 = vcmp.gt.f32.partialorder %v728, 0.0
        %vm753 = vcmp.gt.f32.partialorder %v730, 0.0
        %vm754 = vcmp.gt.f32.partialorder %v733, 0.0
        %vm755 = vcmp.gt.f32.partialorder %v735, 0.0
        %vm756 = vcmp.gt.f32.partialorder %v738, 0.0
        %vm757 = vcmp.gt.f32.partialorder %v740, 0.0
        %vm758 = vcmp.gt.f32.partialorder %v743, 0.0
        %vm759 = vcmp.gt.f32.partialorder %v745, 0.0
        %vm760 = vcmp.gt.f32.partialorder %v748, 0.0
        %vm761 = vcmp.gt.f32.partialorder %v750, 0.0
        %v762 = vmul.f32 %v728, 0.01
        %v763 = vmul.f32 %v730, 0.01
        %v764 = vmul.f32 %v733, 0.01
        %v765 = vmul.f32 %v735, 0.01
        %v766 = vmul.f32 %v738, 0.01
        %v767 = vmul.f32 %v740, 0.01
        %v768 = vmul.f32 %v743, 0.01
        %v769 = vmul.f32 %v745, 0.01
        %v770 = vmul.f32 %v748, 0.01
        %v771 = vmul.f32 %v750, 0.01
        %v772 = vsel %vm752, %v728, %v762
        %v773 = vsel %vm753, %v730, %v763
        %v774 = vsel %vm754, %v733, %v764
        %v775 = vsel %vm755, %v735, %v765
        %v776 = vsel %vm756, %v738, %v766
        %v777 = vsel %vm757, %v740, %v767
        %v778 = vsel %vm758, %v743, %v768
        %v779 = vsel %vm759, %v745, %v769
        %v780 = vsel %vm760, %v748, %v770
        %v781 = vsel %vm761, %v750, %v771
        %v782 = vpack.c.bf16 %v772, %v772
        %v783 = vpack.c.bf16 %v773, %v773
        %v784 = vpack.c.bf16 %v774, %v774
        %v785 = vpack.c.bf16 %v775, %v775
        %v786 = vpack.c.bf16 %v776, %v776
        %v787 = vpack.c.bf16 %v777, %v777
        %v788 = vpack.c.bf16 %v778, %v778
        %v789 = vpack.c.bf16 %v779, %v779
        %v790 = vpack.c.bf16 %v780, %v780
        %v791 = vpack.c.bf16 %v781, %v781
        %v802 = vunpack.c.l.b16 %v782
        %v803 = vunpack.c.l.b16 %v783
        %v804 = vunpack.c.l.b16 %v784
        %v805 = vunpack.c.l.b16 %v785
        %v806 = vunpack.c.l.b16 %v786
        %v807 = vunpack.c.l.b16 %v787
        %v808 = vunpack.c.l.b16 %v788
        %v809 = vunpack.c.l.b16 %v789
        %v810 = vunpack.c.l.b16 %v790
        %v811 = vunpack.c.l.b16 %v791
        %v812 = vpack.c.b16 %v803, %v802
        %v813 = vpack.c.b16 %v805, %v804
        %v814 = vpack.c.b16 %v807, %v806
        %v815 = vpack.c.b16 %v809, %v808
        %v816 = vpack.c.b16 %v811, %v810
        %822 = vrot.lane.b32.xlu0 %v812, 127
        %v823 = vpop.permute.xlu0 %822
        %824 = vrot.lane.b32.xlu0 %v813, 127
        %v825 = vpop.permute.xlu0 %824
        %826 = vrot.lane.b32.xlu0 %v814, 127
        %v827 = vpop.permute.xlu0 %826
        %828 = vrot.lane.b32.xlu0 %v815, 127
        %v829 = vpop.permute.xlu0 %828
        %830 = vrot.lane.b32.xlu0 %v816, 127
        %v831 = vpop.permute.xlu0 %830
        %837 = vrot.lane.b32.xlu0 %v812, 126
        %v838 = vpop.permute.xlu0 %837
        %839 = vrot.lane.b32.xlu0 %v813, 126
        %v840 = vpop.permute.xlu0 %839
        %841 = vrot.lane.b32.xlu0 %v814, 126
        %v842 = vpop.permute.xlu0 %841
        %843 = vrot.lane.b32.xlu0 %v815, 126
        %v844 = vpop.permute.xlu0 %843
        %845 = vrot.lane.b32.xlu0 %v816, 126
        %v846 = vpop.permute.xlu0 %845
        %v852 = vld [vmem:[%s5] sm:$0xff]
        %v853 = vld [vmem:[#allocation2] sm:$0x1]
        %v855 = vperm.slane %v853, 0
        %856 = vset.pattern.permute.xlu0 0
        %857 = vperm.xlu0 %856, %v855
        %v858 = vpop.permute.xlu0 %857
        %v861 = vunpack.c.l.b16 %v852
        %v862 = vunpack.c.h.b16 %v852
        %v863 = vpack.c.b16 %v861, %v861
        %v864 = vpack.c.b16 %v862, %v862
        %vm866 = vcmask 916480
        %v868 = vsel %vm866, %v864, 0
        %870 = vmatpush.bf16.msra.mxu0 %v827
        %871 = vmatpush.bf16.msra.mxu0 %v825
        %872 = vmatpush.bf16.msra.mxu0 %v823
        %873 = vmatpush.bf16.msra.mxu0 %v816
        %874 = vmatpush.bf16.msra.mxu0 %v815
        %875 = vmatpush.bf16.msra.mxu0 %v814
        %876 = vmatpush.bf16.msra.mxu0 %v813
        %877 = vmatpush.bf16.msra.mxu0 %v812
        %878 = vmatmul.bf16.gmra.mxu0 %v863
        %v879 = vpop.f32.mrf.mxu0
        %v880 = vadd.f32 %v858, %v879
        %v881 = vpop.f32.mrf.mxu0
        %882 = vdwg.mxu0
        %883 = vmatpush.bf16.msra.mxu0 0
        %884 = vmatpush.bf16.msra.mxu0 %v846
        %885 = vmatpush.bf16.msra.mxu0 %v844
        %886 = vmatpush.bf16.msra.mxu0 %v842
        %887 = vmatpush.bf16.msra.mxu0 %v840
        %888 = vmatpush.bf16.msra.mxu0 %v838
        %889 = vmatpush.bf16.msra.mxu0 %v831
        %890 = vmatpush.bf16.msra.mxu0 %v829
        %891 = vmatmul.bf16.gmra.mxu0 %v868
        %v892 = vpop.f32.mrf.mxu0
        %v893 = vadd.f32 %v880, %v892
        %v894 = vpop.f32.mrf.mxu0
        %895 = vdwg.mxu0
        %vm896 = vcmp.gt.f32.partialorder %v893, 0.0
        %v897 = vmul.f32 %v893, 0.01
        %v898 = vsel %vm896, %v893, %v897
        %v899 = vld [vmem:[%s7] sm:$0xff]
        %v900 = vld [vmem:[%s7 + $0x8] sm:$0xf]
        %v901 = vld [vmem:[%s8] sm:$0x1]
        %v903 = vperm.slane %v901, 0
        %vm905 = vcmask 97280
        %v907 = vsel %vm905, %v898, 0
        %vm909 = vcmask 1043456
        %v911 = vsel %vm909, %v900, 0
        %913 = vmatpush.msra.mxu0 0.0
        %914 = vmatpush.msra.mxu0 0.0
        %915 = vmatpush.msra.mxu0 0.0
        %916 = vmatpush.msra.mxu0 0.0
        %917 = vmatpush.msra.mxu0 0.0
        %918 = vmatpush.msra.mxu0 0.0
        %919 = vmatpush.msra.mxu0 0.0
        %920 = vmatpush.msra.mxu0 0.0
        %921 = vmatpush.msra.mxu0 0.0
        %922 = vmatpush.msra.mxu0 0.0
        %923 = vmatpush.msra.mxu0 0.0
        %924 = vmatpush.msra.mxu0 0.0
        %925 = vmatpush.msra.mxu0 0.0
        %926 = vmatpush.msra.mxu0 0.0
        %927 = vmatpush.msra.mxu0 %v911
        %928 = vmatpush.msra.mxu0 %v899
        %929 = vmatmul.f32.gmra.mxu0 %v907
        %v930 = vpop.f32.mrf.mxu0
        %v931 = vadd.f32 %v903, %v930
        %932 = vdwg.mxu0
        %v933 = vld [vmem:[%s9] sm:$0xff]
        %v934 = vld [vmem:[%s9 + $0x8] sm:$0xff]
        %v935 = vld [vmem:[%s9 + $0x10] sm:$0x1]
        %v936 = vld [vmem:[%s10] sm:$0x1]
        %vm937 = vcmask 138240
        %v939 = vsel %vm937, 0.0, 0
        %vm941 = vcmask 1040384
        %v943 = vsel %vm941, %v935, 0
        %945 = vmatpush.msra.mxu0 0.0
        %946 = vmatpush.msra.mxu0 0.0
        %947 = vmatpush.msra.mxu0 0.0
        %948 = vmatpush.msra.mxu0 0.0
        %949 = vmatpush.msra.mxu0 0.0
        %950 = vmatpush.msra.mxu0 0.0
        %951 = vmatpush.msra.mxu0 0.0
        %952 = vmatpush.msra.mxu0 0.0
        %953 = vmatpush.msra.mxu0 0.0
        %954 = vmatpush.msra.mxu0 0.0
        %955 = vmatpush.msra.mxu0 0.0
        %956 = vmatpush.msra.mxu0 0.0
        %957 = vmatpush.msra.mxu0 0.0
        %958 = vmatpush.msra.mxu0 %v943
        %959 = vmatpush.msra.mxu0 %v934
        %960 = vmatpush.msra.mxu0 %v933
        %961 = vmatmul.f32.gmra.mxu0 %v939
        %v962 = vpop.f32.mrf.mxu0
        %v963 = vadd.f32 %v936, %v962
        %964 = vdwg.mxu0
        %v965 = vadd.f32 %v931, %v963
        %v966 = vxor.u32 %v965, 2147483648
        %v967 = vmul.f32 %v966, 1.442695
        %v968 = vpow.pop %v967
        %v969 = vadd.f32 %v968, 1.0
        %v970 = vrcp.pop %v969
        %v971 = vmul.f32 %v969, %v970
        %v972 = vsub.f32 1.0, %v971
        %v973 = vmul.f32 %v970, %v972
        %v974 = vadd.f32 %v970, %v973
        %vm975 = vweird.f32 %v969
        %vm976 = vweird.f32 %v970
        %vm977 = vmor %vm975, %vm976
        %v978 = vsel %vm977, %v970, %v974
        %v979 = vand.u32 2147483647, %v969
        %vm980 = vcmp.eq.f32.partialorder %v979, 8.507059e+37
        %v981 = vand.u32 %v969, 2147483648
        %v982 = vor.u32 1.1754944e-38, %v981
        %v983 = vsel %vm980, %v982, %v978
        %v984 = vmul.f32 1.0, %v983
        %986 = vrot.lane.b32.xlu0 %v963, 94
        %v987 = vpop.permute.xlu0 %986
        %v989 = vmul.f32 %v984, %v987
        %991 = vrot.lane.b32.xlu0 %v989, 34
        %v992 = vpop.permute.xlu0 %991
        %v994 = vadd.f32 %v931, %v992
        %v995 = vtanh.pop %v994
        %v996 = vsub.f32 1.0, %v984
        %998 = vrot.lane.b32.xlu0 %v995, 111
        %v999 = vpop.permute.xlu0 %998
        %v1001 = vmul.f32 %v996, %v999
        %v1002 = vmul.f32 %v984, 0.0
        %v1003 = vadd.f32 %v1001, %v1002
        %1005 = vrot.lane.b32.xlu0 %v1003, 111
        %v1006 = vpop.permute.xlu0 %1005
        %v1007 = vsel %vm937, %v1006, 0
        %1009 = vmatpush.msra.mxu0 0.0
        %1010 = vmatpush.msra.mxu0 0.0
        %1011 = vmatpush.msra.mxu0 0.0
        %1012 = vmatpush.msra.mxu0 0.0
        %1013 = vmatpush.msra.mxu0 0.0
        %1014 = vmatpush.msra.mxu0 0.0
        %1015 = vmatpush.msra.mxu0 0.0
        %1016 = vmatpush.msra.mxu0 0.0
        %1017 = vmatpush.msra.mxu0 0.0
        %1018 = vmatpush.msra.mxu0 0.0
        %1019 = vmatpush.msra.mxu0 0.0
        %1020 = vmatpush.msra.mxu0 0.0
        %1021 = vmatpush.msra.mxu0 0.0
        %1022 = vmatpush.msra.mxu0 %v943
        %1023 = vmatpush.msra.mxu0 %v934
        %1024 = vmatpush.msra.mxu0 %v933
        %1025 = vmatmul.f32.gmra.mxu0 %v1007
        %v1026 = vpop.f32.mrf.mxu0
        %v1027 = vadd.f32 %v936, %v1026
        %1028 = vdwg.mxu0
        %v1030 = vrot.slane %v1027, 7
        %v1032 = vadd.f32 %v931, %v1030
        %v1033 = vxor.u32 %v1032, 2147483648
        %v1034 = vmul.f32 %v1033, 1.442695
        %v1035 = vpow.pop %v1034
        %v1036 = vadd.f32 %v1035, 1.0
        %v1037 = vrcp.pop %v1036
        %v1038 = vmul.f32 %v1036, %v1037
        %v1039 = vsub.f32 1.0, %v1038
        %v1040 = vmul.f32 %v1037, %v1039
        %v1041 = vadd.f32 %v1037, %v1040
        %vm1042 = vweird.f32 %v1036
        %vm1043 = vweird.f32 %v1037
        %vm1044 = vmor %vm1042, %vm1043
        %v1045 = vsel %vm1044, %v1037, %v1041
        %v1046 = vand.u32 2147483647, %v1036
        %vm1047 = vcmp.eq.f32.partialorder %v1046, 8.507059e+37
        %v1048 = vand.u32 %v1036, 2147483648
        %v1049 = vor.u32 1.1754944e-38, %v1048
        %v1050 = vsel %vm1047, %v1049, %v1045
        %v1051 = vmul.f32 1.0, %v1050
        %1052 = vrot.lane.b32.xlu0 %v1030, 94
        %v1053 = vpop.permute.xlu0 %1052
        %v1055 = vmul.f32 %v1051, %v1053
        %1057 = vrot.lane.b32.xlu0 %v1055, 34
        %v1058 = vpop.permute.xlu0 %1057
        %v1060 = vadd.f32 %v931, %v1058
        %v1061 = vtanh.pop %v1060
        %v1062 = vsub.f32 1.0, %v1051
        %1064 = vrot.lane.b32.xlu0 %v1061, 111
        %v1065 = vpop.permute.xlu0 %1064
        %v1067 = vmul.f32 %v1062, %v1065
        %v1068 = vrot.slane %v1003, 7
        %v1070 = vmul.f32 %v1051, %v1068
        %v1071 = vadd.f32 %v1067, %v1070
        %v1073 = vrot.slane %v1071, 1
        %1074 = vrot.lane.b32.xlu0 %v1073, 111
        %v1075 = vpop.permute.xlu0 %1074
        %v1076 = vsel %vm937, %v1075, 0
        %1078 = vmatpush.msra.mxu0 0.0
        %1079 = vmatpush.msra.mxu0 0.0
        %1080 = vmatpush.msra.mxu0 0.0
        %1081 = vmatpush.msra.mxu0 0.0
        %1082 = vmatpush.msra.mxu0 0.0
        %1083 = vmatpush.msra.mxu0 0.0
        %1084 = vmatpush.msra.mxu0 0.0
        %1085 = vmatpush.msra.mxu0 0.0
        %1086 = vmatpush.msra.mxu0 0.0
        %1087 = vmatpush.msra.mxu0 0.0
        %1088 = vmatpush.msra.mxu0 0.0
        %1089 = vmatpush.msra.mxu0 0.0
        %1090 = vmatpush.msra.mxu0 0.0
        %1091 = vmatpush.msra.mxu0 %v943
        %1092 = vmatpush.msra.mxu0 %v934
        %1093 = vmatpush.msra.mxu0 %v933
        %1094 = vmatmul.f32.gmra.mxu0 %v1076
        %v1095 = vpop.f32.mrf.mxu0
        %v1096 = vadd.f32 %v936, %v1095
        %1097 = vdwg.mxu0
        %v1099 = vrot.slane %v1096, 6
        %v1101 = vadd.f32 %v931, %v1099
        %v1102 = vxor.u32 %v1101, 2147483648
        %v1103 = vmul.f32 %v1102, 1.442695
        %v1104 = vpow.pop %v1103
        %v1105 = vadd.f32 %v1104, 1.0
        %v1106 = vrcp.pop %v1105
        %v1107 = vmul.f32 %v1105, %v1106
        %v1108 = vsub.f32 1.0, %v1107
        %v1109 = vmul.f32 %v1106, %v1108
        %v1110 = vadd.f32 %v1106, %v1109
        %vm1111 = vweird.f32 %v1105
        %vm1112 = vweird.f32 %v1106
        %vm1113 = vmor %vm1111, %vm1112
        %v1114 = vsel %vm1113, %v1106, %v1110
        %v1115 = vand.u32 2147483647, %v1105
        %vm1116 = vcmp.eq.f32.partialorder %v1115, 8.507059e+37
        %v1117 = vand.u32 %v1105, 2147483648
        %v1118 = vor.u32 1.1754944e-38, %v1117
        %v1119 = vsel %vm1116, %v1118, %v1114
        %v1120 = vmul.f32 1.0, %v1119
        %1121 = vrot.lane.b32.xlu0 %v1099, 94
        %v1122 = vpop.permute.xlu0 %1121
        %v1124 = vmul.f32 %v1120, %v1122
        %1126 = vrot.lane.b32.xlu0 %v1124, 34
        %v1127 = vpop.permute.xlu0 %1126
        %v1129 = vadd.f32 %v931, %v1127
        %v1130 = vtanh.pop %v1129
        %v1131 = vsub.f32 1.0, %v1120
        %1133 = vrot.lane.b32.xlu0 %v1130, 111
        %v1134 = vpop.permute.xlu0 %1133
        %v1136 = vmul.f32 %v1131, %v1134
        %v1137 = vrot.slane %v1071, 7
        %v1139 = vmul.f32 %v1120, %v1137
        %v1140 = vadd.f32 %v1136, %v1139
        %v1142 = vrot.slane %v1140, 2
        %1143 = vrot.lane.b32.xlu0 %v1142, 111
        %v1144 = vpop.permute.xlu0 %1143
        %v1145 = vsel %vm937, %v1144, 0
        %1147 = vmatpush.msra.mxu0 0.0
        %1148 = vmatpush.msra.mxu0 0.0
        %1149 = vmatpush.msra.mxu0 0.0
        %1150 = vmatpush.msra.mxu0 0.0
        %1151 = vmatpush.msra.mxu0 0.0
        %1152 = vmatpush.msra.mxu0 0.0
        %1153 = vmatpush.msra.mxu0 0.0
        %1154 = vmatpush.msra.mxu0 0.0
        %1155 = vmatpush.msra.mxu0 0.0
        %1156 = vmatpush.msra.mxu0 0.0
        %1157 = vmatpush.msra.mxu0 0.0
        %1158 = vmatpush.msra.mxu0 0.0
        %1159 = vmatpush.msra.mxu0 0.0
        %1160 = vmatpush.msra.mxu0 %v943
        %1161 = vmatpush.msra.mxu0 %v934
        %1162 = vmatpush.msra.mxu0 %v933
        %1163 = vmatmul.f32.gmra.mxu0 %v1145
        %v1164 = vpop.f32.mrf.mxu0
        %v1165 = vadd.f32 %v936, %v1164
        %1166 = vdwg.mxu0
        %v1168 = vrot.slane %v1165, 5
        %v1170 = vadd.f32 %v931, %v1168
        %v1171 = vxor.u32 %v1170, 2147483648
        %v1172 = vmul.f32 %v1171, 1.442695
        %v1173 = vpow.pop %v1172
        %v1174 = vadd.f32 %v1173, 1.0
        %v1175 = vrcp.pop %v1174
        %v1176 = vmul.f32 %v1174, %v1175
        %v1177 = vsub.f32 1.0, %v1176
        %v1178 = vmul.f32 %v1175, %v1177
        %v1179 = vadd.f32 %v1175, %v1178
        %vm1180 = vweird.f32 %v1174
        %vm1181 = vweird.f32 %v1175
        %vm1182 = vmor %vm1180, %vm1181
        %v1183 = vsel %vm1182, %v1175, %v1179
        %v1184 = vand.u32 2147483647, %v1174
        %vm1185 = vcmp.eq.f32.partialorder %v1184, 8.507059e+37
        %v1186 = vand.u32 %v1174, 2147483648
        %v1187 = vor.u32 1.1754944e-38, %v1186
        %v1188 = vsel %vm1185, %v1187, %v1183
        %v1189 = vmul.f32 1.0, %v1188
        %1190 = vrot.lane.b32.xlu0 %v1168, 94
        %v1191 = vpop.permute.xlu0 %1190
        %v1193 = vmul.f32 %v1189, %v1191
        %1195 = vrot.lane.b32.xlu0 %v1193, 34
        %v1196 = vpop.permute.xlu0 %1195
        %v1198 = vadd.f32 %v931, %v1196
        %v1199 = vtanh.pop %v1198
        %v1200 = vsub.f32 1.0, %v1189
        %1202 = vrot.lane.b32.xlu0 %v1199, 111
        %v1203 = vpop.permute.xlu0 %1202
        %v1205 = vmul.f32 %v1200, %v1203
        %v1206 = vrot.slane %v1140, 7
        %v1208 = vmul.f32 %v1189, %v1206
        %v1209 = vadd.f32 %v1205, %v1208
        %v1211 = vrot.slane %v1209, 3
        %1212 = vrot.lane.b32.xlu0 %v1211, 111
        %v1213 = vpop.permute.xlu0 %1212
        %v1214 = vsel %vm937, %v1213, 0
        %1216 = vmatpush.msra.mxu0 0.0
        %1217 = vmatpush.msra.mxu0 0.0
        %1218 = vmatpush.msra.mxu0 0.0
        %1219 = vmatpush.msra.mxu0 0.0
        %1220 = vmatpush.msra.mxu0 0.0
        %1221 = vmatpush.msra.mxu0 0.0
        %1222 = vmatpush.msra.mxu0 0.0
        %1223 = vmatpush.msra.mxu0 0.0
        %1224 = vmatpush.msra.mxu0 0.0
        %1225 = vmatpush.msra.mxu0 0.0
        %1226 = vmatpush.msra.mxu0 0.0
        %1227 = vmatpush.msra.mxu0 0.0
        %1228 = vmatpush.msra.mxu0 0.0
        %1229 = vmatpush.msra.mxu0 %v943
        %1230 = vmatpush.msra.mxu0 %v934
        %1231 = vmatpush.msra.mxu0 %v933
        %1232 = vmatmul.f32.gmra.mxu0 %v1214
        %v1233 = vpop.f32.mrf.mxu0
        %v1234 = vadd.f32 %v936, %v1233
        %1235 = vdwg.mxu0
        %v1237 = vrot.slane %v1234, 4
        %v1239 = vadd.f32 %v931, %v1237
        %v1240 = vxor.u32 %v1239, 2147483648
        %v1241 = vmul.f32 %v1240, 1.442695
        %v1242 = vpow.pop %v1241
        %v1243 = vadd.f32 %v1242, 1.0
        %v1244 = vrcp.pop %v1243
        %v1245 = vmul.f32 %v1243, %v1244
        %v1246 = vsub.f32 1.0, %v1245
        %v1247 = vmul.f32 %v1244, %v1246
        %v1248 = vadd.f32 %v1244, %v1247
        %vm1249 = vweird.f32 %v1243
        %vm1250 = vweird.f32 %v1244
        %vm1251 = vmor %vm1249, %vm1250
        %v1252 = vsel %vm1251, %v1244, %v1248
        %v1253 = vand.u32 2147483647, %v1243
        %vm1254 = vcmp.eq.f32.partialorder %v1253, 8.507059e+37
        %v1255 = vand.u32 %v1243, 2147483648
        %v1256 = vor.u32 1.1754944e-38, %v1255
        %v1257 = vsel %vm1254, %v1256, %v1252
        %v1258 = vmul.f32 1.0, %v1257
        %1259 = vrot.lane.b32.xlu0 %v1237, 94
        %v1260 = vpop.permute.xlu0 %1259
        %v1262 = vmul.f32 %v1258, %v1260
        %1264 = vrot.lane.b32.xlu0 %v1262, 34
        %v1265 = vpop.permute.xlu0 %1264
        %v1267 = vadd.f32 %v931, %v1265
        %v1268 = vtanh.pop %v1267
        %v1269 = vsub.f32 1.0, %v1258
        %1271 = vrot.lane.b32.xlu0 %v1268, 111
        %v1272 = vpop.permute.xlu0 %1271
        %v1274 = vmul.f32 %v1269, %v1272
        %v1275 = vrot.slane %v1209, 7
        %v1277 = vmul.f32 %v1258, %v1275
        %v1278 = vadd.f32 %v1274, %v1277
        %v1280 = vrot.slane %v1278, 4
        %1281 = vrot.lane.b32.xlu0 %v1280, 111
        %v1282 = vpop.permute.xlu0 %1281
        %v1283 = vsel %vm937, %v1282, 0
        %1285 = vmatpush.msra.mxu0 0.0
        %1286 = vmatpush.msra.mxu0 0.0
        %1287 = vmatpush.msra.mxu0 0.0
        %1288 = vmatpush.msra.mxu0 0.0
        %1289 = vmatpush.msra.mxu0 0.0
        %1290 = vmatpush.msra.mxu0 0.0
        %1291 = vmatpush.msra.mxu0 0.0
        %1292 = vmatpush.msra.mxu0 0.0
        %1293 = vmatpush.msra.mxu0 0.0
        %1294 = vmatpush.msra.mxu0 0.0
        %1295 = vmatpush.msra.mxu0 0.0
        %1296 = vmatpush.msra.mxu0 0.0
        %1297 = vmatpush.msra.mxu0 0.0
        %1298 = vmatpush.msra.mxu0 %v943
        %1299 = vmatpush.msra.mxu0 %v934
        %1300 = vmatpush.msra.mxu0 %v933
        %1301 = vmatmul.f32.gmra.mxu0 %v1283
        %v1302 = vpop.f32.mrf.mxu0
        %v1303 = vadd.f32 %v936, %v1302
        %1304 = vdwg.mxu0
        %v1306 = vrot.slane %v1303, 3
        %v1308 = vadd.f32 %v931, %v1306
        %v1309 = vxor.u32 %v1308, 2147483648
        %v1310 = vmul.f32 %v1309, 1.442695
        %v1311 = vpow.pop %v1310
        %v1312 = vadd.f32 %v1311, 1.0
        %v1313 = vrcp.pop %v1312
        %v1314 = vmul.f32 %v1312, %v1313
        %v1315 = vsub.f32 1.0, %v1314
        %v1316 = vmul.f32 %v1313, %v1315
        %v1317 = vadd.f32 %v1313, %v1316
        %vm1318 = vweird.f32 %v1312
        %vm1319 = vweird.f32 %v1313
        %vm1320 = vmor %vm1318, %vm1319
        %v1321 = vsel %vm1320, %v1313, %v1317
        %v1322 = vand.u32 2147483647, %v1312
        %vm1323 = vcmp.eq.f32.partialorder %v1322, 8.507059e+37
        %v1324 = vand.u32 %v1312, 2147483648
        %v1325 = vor.u32 1.1754944e-38, %v1324
        %v1326 = vsel %vm1323, %v1325, %v1321
        %v1327 = vmul.f32 1.0, %v1326
        %1328 = vrot.lane.b32.xlu0 %v1306, 94
        %v1329 = vpop.permute.xlu0 %1328
        %v1331 = vmul.f32 %v1327, %v1329
        %1333 = vrot.lane.b32.xlu0 %v1331, 34
        %v1334 = vpop.permute.xlu0 %1333
        %v1336 = vadd.f32 %v931, %v1334
        %v1337 = vtanh.pop %v1336
        %v1338 = vsub.f32 1.0, %v1327
        %1340 = vrot.lane.b32.xlu0 %v1337, 111
        %v1341 = vpop.permute.xlu0 %1340
        %v1343 = vmul.f32 %v1338, %v1341
        %v1344 = vrot.slane %v1278, 7
        %v1346 = vmul.f32 %v1327, %v1344
        %v1347 = vadd.f32 %v1343, %v1346
        %v1349 = vrot.slane %v1347, 5
        %1350 = vrot.lane.b32.xlu0 %v1349, 111
        %v1351 = vpop.permute.xlu0 %1350
        %v1352 = vsel %vm937, %v1351, 0
        %1354 = vmatpush.msra.mxu0 0.0
        %1355 = vmatpush.msra.mxu0 0.0
        %1356 = vmatpush.msra.mxu0 0.0
        %1357 = vmatpush.msra.mxu0 0.0
        %1358 = vmatpush.msra.mxu0 0.0
        %1359 = vmatpush.msra.mxu0 0.0
        %1360 = vmatpush.msra.mxu0 0.0
        %1361 = vmatpush.msra.mxu0 0.0
        %1362 = vmatpush.msra.mxu0 0.0
        %1363 = vmatpush.msra.mxu0 0.0
        %1364 = vmatpush.msra.mxu0 0.0
        %1365 = vmatpush.msra.mxu0 0.0
        %1366 = vmatpush.msra.mxu0 0.0
        %1367 = vmatpush.msra.mxu0 %v943
        %1368 = vmatpush.msra.mxu0 %v934
        %1369 = vmatpush.msra.mxu0 %v933
        %1370 = vmatmul.f32.gmra.mxu0 %v1352
        %v1371 = vpop.f32.mrf.mxu0
        %v1372 = vadd.f32 %v936, %v1371
        %1373 = vdwg.mxu0
        %v1375 = vrot.slane %v1372, 2
        %v1377 = vadd.f32 %v931, %v1375
        %v1378 = vxor.u32 %v1377, 2147483648
        %v1379 = vmul.f32 %v1378, 1.442695
        %v1380 = vpow.pop %v1379
        %v1381 = vadd.f32 %v1380, 1.0
        %v1382 = vrcp.pop %v1381
        %v1383 = vmul.f32 %v1381, %v1382
        %v1384 = vsub.f32 1.0, %v1383
        %v1385 = vmul.f32 %v1382, %v1384
        %v1386 = vadd.f32 %v1382, %v1385
        %vm1387 = vweird.f32 %v1381
        %vm1388 = vweird.f32 %v1382
        %vm1389 = vmor %vm1387, %vm1388
        %v1390 = vsel %vm1389, %v1382, %v1386
        %v1391 = vand.u32 2147483647, %v1381
        %vm1392 = vcmp.eq.f32.partialorder %v1391, 8.507059e+37
        %v1393 = vand.u32 %v1381, 2147483648
        %v1394 = vor.u32 1.1754944e-38, %v1393
        %v1395 = vsel %vm1392, %v1394, %v1390
        %v1396 = vmul.f32 1.0, %v1395
        %1397 = vrot.lane.b32.xlu0 %v1375, 94
        %v1398 = vpop.permute.xlu0 %1397
        %v1400 = vmul.f32 %v1396, %v1398
        %1402 = vrot.lane.b32.xlu0 %v1400, 34
        %v1403 = vpop.permute.xlu0 %1402
        %v1405 = vadd.f32 %v931, %v1403
        %v1406 = vtanh.pop %v1405
        %v1407 = vsub.f32 1.0, %v1396
        %1409 = vrot.lane.b32.xlu0 %v1406, 111
        %v1410 = vpop.permute.xlu0 %1409
        %v1412 = vmul.f32 %v1407, %v1410
        %v1413 = vrot.slane %v1347, 7
        %v1415 = vmul.f32 %v1396, %v1413
        %v1416 = vadd.f32 %v1412, %v1415
        %v1418 = vrot.slane %v1416, 6
        %1419 = vrot.lane.b32.xlu0 %v1418, 111
        %v1420 = vpop.permute.xlu0 %1419
        %v1421 = vsel %vm937, %v1420, 0
        %1423 = vmatpush.msra.mxu0 0.0
        %1424 = vmatpush.msra.mxu0 0.0
        %1425 = vmatpush.msra.mxu0 0.0
        %1426 = vmatpush.msra.mxu0 0.0
        %1427 = vmatpush.msra.mxu0 0.0
        %1428 = vmatpush.msra.mxu0 0.0
        %1429 = vmatpush.msra.mxu0 0.0
        %1430 = vmatpush.msra.mxu0 0.0
        %1431 = vmatpush.msra.mxu0 0.0
        %1432 = vmatpush.msra.mxu0 0.0
        %1433 = vmatpush.msra.mxu0 0.0
        %1434 = vmatpush.msra.mxu0 0.0
        %1435 = vmatpush.msra.mxu0 0.0
        %1436 = vmatpush.msra.mxu0 %v943
        %1437 = vmatpush.msra.mxu0 %v934
        %1438 = vmatpush.msra.mxu0 %v933
        %1439 = vmatmul.f32.gmra.mxu0 %v1421
        %v1440 = vpop.f32.mrf.mxu0
        %v1441 = vadd.f32 %v936, %v1440
        %1442 = vdwg.mxu0
        %v1444 = vrot.slane %v1441, 1
        %v1446 = vadd.f32 %v931, %v1444
        %v1447 = vxor.u32 %v1446, 2147483648
        %v1448 = vmul.f32 %v1447, 1.442695
        %v1449 = vpow.pop %v1448
        %v1450 = vadd.f32 %v1449, 1.0
        %v1451 = vrcp.pop %v1450
        %v1452 = vmul.f32 %v1450, %v1451
        %v1453 = vsub.f32 1.0, %v1452
        %v1454 = vmul.f32 %v1451, %v1453
        %v1455 = vadd.f32 %v1451, %v1454
        %vm1456 = vweird.f32 %v1450
        %vm1457 = vweird.f32 %v1451
        %vm1458 = vmor %vm1456, %vm1457
        %v1459 = vsel %vm1458, %v1451, %v1455
        %v1460 = vand.u32 2147483647, %v1450
        %vm1461 = vcmp.eq.f32.partialorder %v1460, 8.507059e+37
        %v1462 = vand.u32 %v1450, 2147483648
        %v1463 = vor.u32 1.1754944e-38, %v1462
        %v1464 = vsel %vm1461, %v1463, %v1459
        %v1465 = vmul.f32 1.0, %v1464
        %1466 = vrot.lane.b32.xlu0 %v1444, 94
        %v1467 = vpop.permute.xlu0 %1466
        %v1469 = vmul.f32 %v1465, %v1467
        %1471 = vrot.lane.b32.xlu0 %v1469, 34
        %v1472 = vpop.permute.xlu0 %1471
        %v1474 = vadd.f32 %v931, %v1472
        %v1475 = vtanh.pop %v1474
        %v1476 = vsub.f32 1.0, %v1465
        %1478 = vrot.lane.b32.xlu0 %v1475, 111
        %v1479 = vpop.permute.xlu0 %1478
        %v1481 = vmul.f32 %v1476, %v1479
        %v1482 = vrot.slane %v1416, 7
        %v1484 = vmul.f32 %v1465, %v1482
        %v1485 = vadd.f32 %v1481, %v1484
        %vm1486 = vcmp.gt.f32.partialorder %v1485, 0.0
        %v1487 = vmul.f32 %v1485, 0.01
        %v1488 = vsel %vm1486, %v1485, %v1487
        %v1489 = vld [vmem:[%s497] sm:$0x1]
        %1491 = vrot.lane.b32.xlu0 %v1488, 111
        %v1492 = vpop.permute.xlu0 %1491
        %v1495 = vperm.slane %v1489, 0
        %1496 = vrot.lane.b32.xlu0 %v1495, 17
        %v1497 = vpop.permute.xlu0 %1496
        %v1499 = vsel %vm937, %v1492, %v1497
        %v1500 = vld [vmem:[%s11] sm:$0xff]
        %v1501 = vld [vmem:[%s11 + $0x8] sm:$0xff]
        %v1502 = vld [vmem:[%s11 + $0x10] sm:$0xff]
        %v1503 = vld [vmem:[%s11 + $0x18] sm:$0xff]
        %v1504 = vld [vmem:[%s11 + $0x20] sm:$0x3]
        %v1505 = vld [vmem:[%s12] sm:$0x1]
        %v1507 = vrot.slane %v1499, 7
        %vm1508 = vcmask 277504
        %v1509 = vsel %vm1508, %v1507, 0
        %vm1511 = vcmask 1041408
        %v1513 = vsel %vm1511, %v1504, 0
        %1515 = vmatpush.msra.mxu0 0.0
        %1516 = vmatpush.msra.mxu0 0.0
        %1517 = vmatpush.msra.mxu0 0.0
        %1518 = vmatpush.msra.mxu0 0.0
        %1519 = vmatpush.msra.mxu0 0.0
        %1520 = vmatpush.msra.mxu0 0.0
        %1521 = vmatpush.msra.mxu0 0.0
        %1522 = vmatpush.msra.mxu0 0.0
        %1523 = vmatpush.msra.mxu0 0.0
        %1524 = vmatpush.msra.mxu0 0.0
        %1525 = vmatpush.msra.mxu0 0.0
        %1526 = vmatpush.msra.mxu0 %v1513
        %1527 = vmatpush.msra.mxu0 %v1503
        %1528 = vmatpush.msra.mxu0 %v1502
        %1529 = vmatpush.msra.mxu0 %v1501
        %1530 = vmatpush.msra.mxu0 %v1500
        %1531 = vmatmul.f32.gmra.mxu0 %v1509
        %v1532 = vpop.f32.mrf.mxu0
        %v1533 = vadd.f32 %v1505, %v1532
        %1534 = vdwg.mxu0
        %v1535 = vmax.f32 %v1533, -20.0
        %v1536 = vmin.f32 %v1535, 2.0
        %v1537 = vmul.f32 %v1536, 1.442695
        %v1538 = vpow.pop %v1537
        %v1539 = vld [vmem:[%s500] sm:$0x1]
        %v1541 = vperm.slane %v1539, 0
        %1542 = vrot.lane.b32.xlu0 %v1541, 17
        %v1543 = vpop.permute.xlu0 %1542
        %v1545 = vmul.f32 %v1538, %v1543
        %1547 = vrot.lane.b32.xlu0 %v1545, 111
        %v1548 = vpop.permute.xlu0 %1547
        %v1550 = vadd.f32 %v1533, %v1548
        %v1551 = vtanh.pop %v1550
        %v1552 = vmul.f32 %v1539, -0.5
        %v1553 = vmul.f32 %v1552, %v1539
        %1555 = vrot.lane.b32.xlu0 %v1536, 111
        %v1556 = vpop.permute.xlu0 %1555
        %v1558 = vsub.f32 %v1553, %v1556
        %v1559 = vsub.f32 %v1558, 0.9189385
        %v1560 = vmul.f32 %v1551, %v1551
        %v1561 = vsub.f32 1.0, %v1560
        %v1562 = vadd.f32 %v1561, 1e-06
        %v1563 = vlog2.pop %v1562
        %v1564 = vmul.f32 %v1563, 0.6931472
        %v1565 = vsub.f32 %v1559, %v1564
        %vm1566 = vcmask 131072
        %v1567 = vsel %vm1566, %v1565, 0.0
        %1568 = vadd.xlane.f32.xlu0 %v1567
        %v1569 = vpop.xlane.xlu0 %1568
        %vm1570 = vcmask 0
        %1571 = vst.msk [vmem:[%s503] sm:$0x1] %vm1570, %v1569
        %v1572 = vadd.f32 %v1551, 1.0
        %v1573 = vsel %vm1566, %v1572, 0.0
        %1574 = vadd.xlane.f32.xlu0 %v1573
        %v1575 = vpop.xlane.xlu0 %1574
        %v1576 = vrcp.pop %v1575
        %v1577 = vmul.f32 %v1572, %v1576
        %1578 = vst.msk [vmem:[%s484] sm:$0x1] %vm1566, %v1577
        %s1579 = sand.u32 %s327, 1
        %s1580 = scalar_lea.sflag [#allocation4], %s1579
        %s1581 = sand.u32 %s327, 1
        %s1582 = scalar_lea.vmem [#allocation3], %s1581
        %p1583 = scmp.lt.s32.totalorder %s31, 1
        %s1584 = scalar_select %p1583, %s31, 1
        %s1585 = scalar_lea.vmem %s14, %s1584
        // Predicated region
        $region73: #{tpu_custom_call.1} parent=71 // pred_check
          %p1586 = pneg %p337
        $region74: #{tpu_custom_call.1} parent=71 // pred_check_branch
          %1588 = sbr.rel (%p1586) target = $region76
        $region75: #{tpu_custom_call.1} parent=71 // pred_region
          %1590 = vsyncadd %s1580, 0
          %s1591 = scalar_lea.hbm %s13, %s31
          %s1593 = sshll.u32 %s1582, 4
          %s1594 = int_to_ptr.vmem [resolvable:$true] %s1593
          %s1595 = sshll.u32 %s1591, 4
          %s1596 = int_to_ptr.hbm [resolvable:$true] %s1595
          %1598 = dma.vmem_to_hbm [thread:$0]  %s1594, 16, %s1596, %s1580
        $region76: #{tpu_custom_call.1} parent=71 // pred_fallthru
          _
        // Predicated region
        $region77: #{tpu_custom_call.1} parent=71 // pred_check
          %p1599 = pneg %p363
        $region78: #{tpu_custom_call.1} parent=71 // pred_check_branch
          %1601 = sbr.rel (%p1599) target = $region80
        $region79: #{tpu_custom_call.1} parent=71 // pred_region
          _
        $region80: #{tpu_custom_call.1} parent=71 // pred_fallthru
          _
      $region72: #{tpu_custom_call.1} parent=5 // pred_fallthru
        _
      %p1602 = scmp.le.s32.totalorder 2, %s26
      // Predicated region
      $region81: #{tpu_custom_call.1} parent=5 // pred_check
        %p1603 = pneg %p1602
      $region82: #{tpu_custom_call.1} parent=5 // pred_check_branch
        %1605 = sbr.rel (%p1603) target = $region84
      $region83: #{tpu_custom_call.1} parent=5 // pred_region
        %s1606 = ssub.s32 %s26, 2
        // Predicated region
        $region85: #{tpu_custom_call.1} parent=83 // pred_check
          %p1607 = pneg %p343
        $region86: #{tpu_custom_call.1} parent=83 // pred_check_branch
          %1609 = sbr.rel (%p1607) target = $region88
        $region87: #{tpu_custom_call.1} parent=83 // pred_region
          %s1610 = sand.u32 %s328, 1
          %s1611 = scalar_lea.sflag [#allocation4], %s1610
          %s1612 = sand.u32 %s328, 1
          %s1613 = scalar_lea.vmem [#allocation3], %s1612
          %1615 = dma.done %s1611, 16
        $region88: #{tpu_custom_call.1} parent=83 // pred_fallthru
          _
        // Predicated region
        $region89: #{tpu_custom_call.1} parent=83 // pred_check
          %p1616 = pneg %p369
        $region90: #{tpu_custom_call.1} parent=83 // pred_check_branch
          %1618 = sbr.rel (%p1616) target = $region92
        $region91: #{tpu_custom_call.1} parent=83 // pred_region
          %p1619 = scmp.lt.s32.totalorder %s32, 1
          %s1620 = scalar_select %p1619, %s32, 1
          %s1621 = scalar_lea.vmem %s14, %s1620
        $region92: #{tpu_custom_call.1} parent=83 // pred_fallthru
          _
      $region84: #{tpu_custom_call.1} parent=5 // pred_fallthru
        _
    $region6: #{tpu_custom_call.1} parent=1 // loop_footer
      %s30 = sadd.s32 1, %s26
    $region7: #{tpu_custom_call.1} parent=1 // loop_footer_branch
      %25 = sbr.rel target = $region3
    $region8: #{tpu_custom_call.1} parent=1 // loop_exit
      _
    %1622 = vsyncpa [#allocation4], 1
    %s1623 = scalar_lea.sflag [#allocation4], 1
    %1624 = vsyncpa %s1623, 1

</llo_original>
